<compile_context>
chip_gen: v7x
topology: tpu7x:2x2x1
jax: 0.10.0
libtpu: 0.0.40
codegen_flags: <defaults>
</compile_context>

<pallas_src>
import jax
import jax.numpy as jnp
from jax.experimental import pallas as pl
from jax.experimental.pallas import tpu as pltpu

# ---------------- configuration (small synthetic sizes) ----------------
B      = 2        # batch
HIDDEN = 32       # _hidden_size
VFD    = 32       # cfg.features.visual_feature_dim
OFD    = 32       # cfg.features.object_feature_dim
NOBJ   = 4        # cfg.memory.num_objects
NCAT   = 16       # cfg.features.object_category_num
NACT   = 4        # action_space.n
NPREV  = 32       # prev_action_embedding dim
H2     = HIDDEN // 2   # per-branch RNN hidden size (int(hidden/2))
G6     = 6 * H2        # wide-GRU gate width: [r_vis r_obj | z_vis z_obj | n_vis n_obj]
OUT_W  = 128           # lane-dense packed output width

# ---- activation slab lane offsets ([B, ACT_W] f32, packed in glue) ----
L_ORAW = 0                     # curr_obj_embedding_raw  [B, NOBJ*OFD]
L_CEMB = 128                   # category embedding      [B, NOBJ*OFD]
L_COBJ = 256                   # curr_obj_context        [B, NOBJ*OFD]
L_GOBJ = 384                   # goal_obj_context        [B, NOBJ*OFD]
L_VIS  = 512                   # curr_ctx | goal_ctx | curr_emb  (96)
L_H    = 608                   # masked rnn hidden (vis|obj)     (32)
L_PACT = 640                   # prev-action embedding           (32)
ACT_W  = 672

# ---- weight slab row offsets ([W_ROWS, 384] bf16) ----
NBIAS = 8                      # rows 0..5 used, padded to 8
R_W1  = NBIAS                  # [512, 384]: obj layer1 (cat pre 0:128 | ofc partial 128:384)
R_W2  = R_W1 + 4 * 128         # [128, 256]: cat_h -> ofc (cat_w2 folded into ofc_w1c), block-diag
R_W3  = R_W2 + 128             # [256,  96]: ofc_h -> gi_obj (ofc_w2 folded into go_wih), block-diag
R_W4  = R_W3 + 256             # [160, 320]: vis|h|pact -> vh|a2h|a4h (0:128) | gh (128:224) | gi_pact (224:320)
R_W5  = R_W4 + 160             # [128,  64]: vh|a2h|a4h -> vis_feats (0:32) | progress (32) | goal (33)
R_W6  = R_W5 + 128             # [ 32,  96]: vis_feats -> gi_vis
W_ROWS = R_W6 + 32             # 1224
W_COLS = 384

# advisory cost estimate (flops = 2 * B * sum(K*N) over the 6 dots)
_DOT_KN = (512 * 384 + 128 * 256 + 256 * 96 + 160 * 320 + 128 * 64 + 32 * 96)
_COST = pl.CostEstimate(
    flops=2 * B * _DOT_KN,
    transcendentals=B * (2 * G6 + 2),
    bytes_accessed=W_ROWS * W_COLS * 2 + B * ACT_W * 4 + B * OUT_W * 4)


# ---------------- fused kernel ----------------
def _tsgm_kernel(act_ref, w_ref, out_ref):
    f32 = jnp.float32
    bf16 = jnp.bfloat16

    def dot(a, b):
        return jnp.dot(a.astype(bf16), b, preferred_element_type=f32)

    relu = lambda v: jnp.maximum(v, 0.0)
    sig = jax.nn.sigmoid

    act = act_ref[...]                                   # [B, 672] f32

    # bias / extra rows (bf16, promoted to f32 on use)
    b_cat1  = w_ref[0:1, 0:128]                          # Cat layer-1 bias (tiled per object)
    b_ofc1  = w_ref[1:2, 0:256]                          # obj_fc layer-1 bias (+ folded cat_b2)
    b_v1gh  = w_ref[2:3, 0:224]                          # [vfc_b1|a2_b1|a4_b1 | bhh_wide]
    b_v2    = w_ref[3:4, 0:64]                           # [vfc_b2 | a2_b2 | a4_b2 | 0...]
    b_gi    = w_ref[4:5, 0:96]                           # bih_wide (+ folded ofc_b2 path)
    w_goal  = w_ref[5:6, 0:96]                           # sigmoid(goal) row of gv_wih (widened)

    # ---------- object path: 3 dependent wide dots ----------
    d1 = dot(act[:, 0:512], w_ref[R_W1:R_W1 + 512, 0:384])          # [B, 384]
    cat_h = relu(d1[:, 0:128] + b_cat1)                             # [B, 128]
    d2 = dot(cat_h, w_ref[R_W2:R_W2 + 128, 0:256])                  # [B, 256]
    ofc_h = relu(d1[:, 128:384] + d2 + b_ofc1)                      # [B, 256]
    gi_obj = dot(ofc_h, w_ref[R_W3:R_W3 + 256, 0:96])               # [B, 96]

    # ---------- visual path + gh + prev-action, column-stacked ----------
    d4 = dot(act[:, L_VIS:ACT_W], w_ref[R_W4:R_W4 + 160, 0:320])    # [B, 320]
    v1 = relu(d4[:, 0:128] + b_v1gh[:, 0:128])                      # [vh | a2h | a4h]
    gh = d4[:, 128:224] + b_v1gh[:, 128:224]                        # [B, 96]
    gi_pact = d4[:, 224:320]                                        # [B, 96]
    d5 = dot(v1, w_ref[R_W5:R_W5 + 128, 0:64]) + b_v2               # [B, 64]
    vis_feats = relu(d5[:, 0:32])                                   # [B, 32]
    aux = d5[:, 32:64]                                              # lane0=progress lane1=goal
    sig_goal = sig(d5[:, 33:34])                                    # [B, 1]
    gi_vis = dot(vis_feats, w_ref[R_W6:R_W6 + 32, 0:96])            # [B, 96]

    # ---------- fused two-branch masked GRU step (vis + obj, 96 gate cols) ----------
    h = act[:, L_H:L_H + HIDDEN]                                    # pre-masked in glue
    gi = gi_obj + gi_vis + gi_pact + sig_goal * w_goal + b_gi       # [B, 96]
    r = sig(gi[:, 0:2 * H2] + gh[:, 0:2 * H2])
    z = sig(gi[:, 2 * H2:4 * H2] + gh[:, 2 * H2:4 * H2])
    n = jnp.tanh(gi[:, 4 * H2:6 * H2] + r * gh[:, 4 * H2:6 * H2])   # b_hn kept inside r*(.)
    new_h = (1.0 - z) * n + z * h                                   # [B, 32]; lanes 0:16 vis, 16:32 obj

    # ---------- single full-width lane-dense store ----------
    out_ref[...] = jnp.concatenate(
        [new_h, aux, jnp.zeros((B, OUT_W - 2 * HIDDEN), f32)], axis=1)


# ---------------- parameter init (deterministic, mirrors weights_init) ----------------
def init_params(key):
    keys = iter(jax.random.split(key, 32))

    def lin(fin, fout):
        w = 0.02 * jax.random.normal(next(keys), (fin, fout), jnp.float32)   # normal(0, 0.02)
        b = jnp.full((1, fout), 0.001, jnp.float32)                           # bias = 0.001
        return w, b

    p = {}
    p['prev_action_emb'] = 0.02 * jax.random.normal(next(keys), (NACT + 1, NPREV), jnp.float32)
    p['obj_category_emb'] = 0.02 * jax.random.normal(next(keys), (NCAT, OFD), jnp.float32)
    p['cat_w1'], p['cat_b1'] = lin(2 * OFD, OFD)          # Cat
    p['cat_w2'], p['cat_b2'] = lin(OFD, OFD)
    p['ofc_w1'], p['ofc_b1'] = lin(3 * OFD, 2 * HIDDEN)   # obj_fc
    p['ofc_w2'], p['ofc_b2'] = lin(2 * HIDDEN, OFD)
    p['vfc_w1'], p['vfc_b1'] = lin(3 * VFD, 2 * HIDDEN)   # visual_fc
    p['vfc_w2'], p['vfc_b2'] = lin(2 * HIDDEN, HIDDEN)
    p['a2_w1'], p['a2_b1'] = lin(2 * VFD, VFD)            # pred_aux2
    p['a2_w2'], p['a2_b2'] = lin(VFD, 1)
    p['a4_w1'], p['a4_b1'] = lin(2 * VFD, VFD)            # pred_aux4
    p['a4_w2'], p['a4_b2'] = lin(VFD, 1)
    p['gv_wih'], p['gv_bih'] = lin(HIDDEN + 1 + NPREV, 3 * H2)   # state_encoder_vis (GRU)
    p['gv_whh'], p['gv_bhh'] = lin(H2, 3 * H2)
    p['go_wih'], p['go_bih'] = lin(NOBJ * OFD + NPREV, 3 * H2)   # state_encoder_obj (GRU)
    p['go_whh'], p['go_bhh'] = lin(H2, 3 * H2)
    return p


# ---------------- one-time weight packing into the single bf16 slab ----------------
def _widen_gru(w, branch):
    """[K, 3*H2] (r|z|n) -> [K, G6] placing gates at vis (branch=0) or obj (branch=1) cols."""
    K = w.shape[0]
    out = jnp.zeros((K, G6), w.dtype)
    off = branch * H2
    for g in range(3):
        out = out.at[:, 2 * g * H2 + off:2 * g * H2 + off + H2].set(w[:, g * H2:(g + 1) * H2])
    return out


def pack_params(p):
    f32 = jnp.float32
    eye = jnp.eye(NOBJ, dtype=f32)
    bd = lambda m: jnp.kron(eye, m)                                  # per-object block diagonal

    go_wih_obj_w = _widen_gru(p['go_wih'][0:NOBJ * OFD], 1)          # [128, 96]
    pact_w = (_widen_gru(p['gv_wih'][HIDDEN + 1:], 0)
              + _widen_gru(p['go_wih'][NOBJ * OFD:], 1))             # [32, 96]
    whh_w = jnp.concatenate([_widen_gru(p['gv_whh'], 0),
                             _widen_gru(p['go_whh'], 1)], axis=0)    # [32, 96]
    bhh_w = _widen_gru(p['gv_bhh'], 0) + _widen_gru(p['go_bhh'], 1)  # [1, 96]
    goal_w = _widen_gru(p['gv_wih'][HIDDEN:HIDDEN + 1], 0)           # [1, 96]
    obj_feats_bias = jnp.tile(p['ofc_b2'], (1, NOBJ))                # [1, 128]
    bih_w = (_widen_gru(p['gv_bih'], 0) + _widen_gru(p['go_bih'], 1)
             + obj_feats_bias @ go_wih_obj_w)                        # [1, 96] (ofc_b2 path folded)

    W = jnp.zeros((W_ROWS, W_COLS), f32)

    # ---- bias / extra rows ----
    W = W.at[0, 0:128].set(jnp.tile(p['cat_b1'], (1, NOBJ))[0])
    ofc_b1_eff = (jnp.tile(p['ofc_b1'], (1, NOBJ))
                  + jnp.tile(p['cat_b2'] @ p['ofc_w1'][2 * OFD:3 * OFD], (1, NOBJ)))
    W = W.at[1, 0:256].set(ofc_b1_eff[0])
    W = W.at[2, 0:64].set(p['vfc_b1'][0])
    W = W.at[2, 64:96].set(p['a2_b1'][0])
    W = W.at[2, 96:128].set(p['a4_b1'][0])
    W = W.at[2, 128:224].set(bhh_w[0])
    W = W.at[3, 0:32].set(p['vfc_b2'][0])
    W = W.at[3, 32].set(p['a2_b2'][0, 0])
    W = W.at[3, 33].set(p['a4_b2'][0, 0])
    W = W.at[4, 0:96].set(bih_w[0])
    W = W.at[5, 0:96].set(goal_w[0])

    # ---- W1 [512, 384]: object layer 1 (Cat layer1 + obj_fc layer1 ctx part) ----
    W = W.at[R_W1:R_W1 + 128, 0:128].set(bd(p['cat_w1'][0:OFD]))
    W = W.at[R_W1 + 128:R_W1 + 256, 0:128].set(bd(p['cat_w1'][OFD:2 * OFD]))
    W = W.at[R_W1 + 256:R_W1 + 384, 128:384].set(bd(p['ofc_w1'][0:OFD]))
    W = W.at[R_W1 + 384:R_W1 + 512, 128:384].set(bd(p['ofc_w1'][OFD:2 * OFD]))
    # ---- W2 [128, 256]: Cat layer2 folded into obj_fc layer1 (curr_obj_emb rows) ----
    W = W.at[R_W2:R_W2 + 128, 0:256].set(bd(p['cat_w2'] @ p['ofc_w1'][2 * OFD:3 * OFD]))
    # ---- W3 [256, 96]: obj_fc layer2 folded into obj-branch GRU input weights ----
    w3 = jnp.concatenate(
        [p['ofc_w2'] @ go_wih_obj_w[o * OFD:(o + 1) * OFD] for o in range(NOBJ)], axis=0)
    W = W.at[R_W3:R_W3 + 256, 0:96].set(w3)
    # ---- W4 [160, 320]: vis|h|pact -> vh|a2h|a4h | gh | gi_pact ----
    W = W.at[R_W4:R_W4 + 96, 0:64].set(p['vfc_w1'])
    W = W.at[R_W4:R_W4 + 64, 64:96].set(p['a2_w1'])
    W = W.at[R_W4:R_W4 + 64, 96:128].set(p['a4_w1'])
    W = W.at[R_W4 + 96:R_W4 + 128, 128:224].set(whh_w)
    W = W.at[R_W4 + 128:R_W4 + 160, 224:320].set(pact_w)
    # ---- W5 [128, 64]: block-diagonal second layer (vis_feats | progress | goal) ----
    W = W.at[R_W5:R_W5 + 64, 0:32].set(p['vfc_w2'])
    W = W.at[R_W5 + 64:R_W5 + 96, 32:33].set(p['a2_w2'])
    W = W.at[R_W5 + 96:R_W5 + 128, 33:34].set(p['a4_w2'])
    # ---- W6 [32, 96]: vis_feats -> vis-branch GRU input weights ----
    W = W.at[R_W6:R_W6 + 32, 0:96].set(_widen_gru(p['gv_wih'][0:HIDDEN], 0))

    assert W.shape == (W_ROWS, W_COLS)
    return {'wslab': W.astype(jnp.bfloat16),
            'prev_action_emb': p['prev_action_emb'],
            'obj_category_emb': p['obj_category_emb']}


# ---------------- full forward (jitted glue + single fused kernel) ----------------
@jax.jit
def tsgm_forward(packed, obs, rnn_hidden_states, prev_actions, masks):
    # prev_actions = Embedding(((a+1)*mask).long())  -- gather in (fused) glue
    idx = ((prev_actions.astype(jnp.float32) + 1.0) * masks).astype(jnp.int32)[:, 0]
    pact = packed['prev_action_emb'][idx]                                      # [B, NPREV]

    # TODO(synk): img_encoder / perception_unit / transforms are undefined externally;
    #             their outputs are provided as synthetic observation fields.
    # CategoryEncoding approximated as an embedding-table lookup (glue gather).
    cat_emb = packed['obj_category_emb'][obs['object_category']]               # [B, NOBJ, OFD]

    lanes = lambda x: x.reshape(B, NOBJ * OFD)        # objects along lanes, batch-major
    h = rnn_hidden_states[0] * masks                  # RNNStateEncoder masks hidden first

    act = jnp.concatenate([
        lanes(obs['curr_obj_embedding_raw']), lanes(cat_emb),
        lanes(obs['curr_obj_context']), lanes(obs['goal_obj_context']),
        obs['curr_context'], obs['goal_context'], obs['curr_embedding'],
        h, pact], axis=1).astype(jnp.float32)                                  # [B, 672]

    out = pl.pallas_call(
        _tsgm_kernel,
        out_shape=jax.ShapeDtypeStruct((B, OUT_W), jnp.float32),
        in_specs=[pl.BlockSpec(memory_space=pltpu.MemorySpace.VMEM),
                  pl.BlockSpec(memory_space=pltpu.MemorySpace.VMEM)],
        out_specs=pl.BlockSpec(memory_space=pltpu.MemorySpace.VMEM),
        cost_estimate=_COST,
    )(act, packed['wslab'])

    x = out[:, 0:HIDDEN]                              # cat(vis_x, obj_x)
    rnn_hidden_new = x[None]                          # [1, B, HIDDEN] (new hidden == GRU output)
    progress = out[:, HIDDEN:HIDDEN + 1]              # pred_aux2
    goal = out[:, HIDDEN + 1:HIDDEN + 2]              # pred_aux4
    preds = (progress, goal)
    ffeatures = None  # TODO(synk): produced by the undefined Perception module
    return x, rnn_hidden_new, preds, ffeatures


# ---------------- pure-JAX reference (same math, no Pallas, unpacked params) ----------------
def reference_forward(params, obs, rnn_hidden_states, prev_actions, masks):
    p = params
    relu = lambda v: jnp.maximum(v, 0.0)
    sig = jax.nn.sigmoid
    idx = ((prev_actions.astype(jnp.float32) + 1.0) * masks).astype(jnp.int32)[:, 0]
    pact = p['prev_action_emb'][idx]
    cat_emb = p['obj_category_emb'][obs['object_category']]
    cat_in = jnp.concatenate([obs['curr_obj_embedding_raw'], cat_emb], axis=-1)
    curr_obj_emb = relu(cat_in @ p['cat_w1'] + p['cat_b1']) @ p['cat_w2'] + p['cat_b2']
    obj_ctx = jnp.concatenate([obs['curr_obj_context'], obs['goal_obj_context']], axis=-1)
    ofc_in = jnp.concatenate([obj_ctx, curr_obj_emb], axis=-1)
    obj_feats = (relu(ofc_in @ p['ofc_w1'] + p['ofc_b1']) @ p['ofc_w2'] + p['ofc_b2']).reshape(B, -1)
    vis_ctx = jnp.concatenate([obs['curr_context'], obs['goal_context']], axis=-1)
    vin = jnp.concatenate([vis_ctx, obs['curr_embedding']], axis=-1)
    vis_feats = relu(relu(vin @ p['vfc_w1'] + p['vfc_b1']) @ p['vfc_w2'] + p['vfc_b2'])
    progress = relu(vis_ctx @ p['a2_w1'] + p['a2_b1']) @ p['a2_w2'] + p['a2_b2']
    goal = relu(vis_ctx @ p['a4_w1'] + p['a4_b1']) @ p['a4_w2'] + p['a4_b2']

    def gru(x, h, wih, bih, whh, bhh):
        gi = x @ wih + bih
        gh = h @ whh + bhh
        r = sig(gi[:, :H2] + gh[:, :H2])
        z = sig(gi[:, H2:2 * H2] + gh[:, H2:2 * H2])
        n = jnp.tanh(gi[:, 2 * H2:] + r * gh[:, 2 * H2:])
        return (1.0 - z) * n + z * h

    h_vis, h_obj = jnp.split(rnn_hidden_states, 2, axis=-1)
    hv = gru(jnp.concatenate([vis_feats, sig(goal), pact], -1), h_vis[0] * masks,
             p['gv_wih'], p['gv_bih'], p['gv_whh'], p['gv_bhh'])
    ho = gru(jnp.concatenate([obj_feats, pact], -1), h_obj[0] * masks,
             p['go_wih'], p['go_bih'], p['go_whh'], p['go_bhh'])
    x = jnp.concatenate([hv, ho], -1)
    return x, x[None], (progress, goal)


# ---------------- main ----------------
if __name__ == "__main__":
    key = jax.random.PRNGKey(0)
    pkey, dkey = jax.random.split(key)
    params = init_params(pkey)
    packed = pack_params(params)          # one-time weight packing into the bf16 slab
    dks = jax.random.split(dkey, 10)

    obs = {
        'curr_embedding':          jax.random.normal(dks[0], (B, VFD), jnp.float32),
        'curr_context':            jax.random.normal(dks[1], (B, VFD), jnp.float32),
        'goal_context':            jax.random.normal(dks[2], (B, VFD), jnp.float32),
        'curr_obj_embedding_raw':  jax.random.normal(dks[3], (B, NOBJ, OFD), jnp.float32),
        'object_category':         jax.random.randint(dks[4], (B, NOBJ), 0, NCAT),
        'curr_obj_context':        jax.random.normal(dks[5], (B, NOBJ, OFD), jnp.float32),
        'goal_obj_context':        jax.random.normal(dks[6], (B, NOBJ, OFD), jnp.float32),
    }
    rnn_hidden = jax.random.normal(dks[7], (1, B, HIDDEN), jnp.float32)
    prev_actions = jax.random.randint(dks[8], (B, 1), 0, NACT)
    masks = jnp.ones((B, 1), jnp.float32)

    out = tsgm_forward(packed, obs, rnn_hidden, prev_actions, masks)
    x, h_new, preds, ff = jax.block_until_ready(out)

    # sanity check vs pure-JAX f32 reference (bf16 matmul operands => looser tol)
    x_ref, h_ref, preds_ref = reference_forward(params, obs, rnn_hidden, prev_actions, masks)
    assert jnp.allclose(x, x_ref, atol=1e-2, rtol=1e-2)
    assert jnp.allclose(h_new, h_ref, atol=1e-2, rtol=1e-2)
    assert jnp.allclose(preds[0], preds_ref[0], atol=1e-2, rtol=1e-2)
    assert jnp.allclose(preds[1], preds_ref[1], atol=1e-2, rtol=1e-2)
    assert x.shape == (B, HIDDEN) and h_new.shape == (1, B, HIDDEN)

    print("KERNEL_OK")
</pallas_src>

<mosaic_0001>
module attributes {stable_mosaic.version = 11 : i64} {
  func.func @_tsgm_kernel(%arg0: memref<2x672xf32, #tpu.memory_space<vmem>>, %arg1: memref<1224x384xbf16, #tpu.memory_space<vmem>>, %arg2: memref<2x128xf32, #tpu.memory_space<vmem>>) attributes {dimension_semantics = [], scalar_prefetch = 0 : i64, scratch_operands = 0 : i64, tpu.core_type = #tpu.core_type<tc>} {
    %c0 = arith.constant 0 : index
    %c0_0 = arith.constant 0 : index
    %0 = vector.load %arg0[%c0, %c0_0] : memref<2x672xf32, #tpu.memory_space<vmem>>, vector<2x672xf32>
    %c0_1 = arith.constant 0 : index
    %c0_2 = arith.constant 0 : index
    %1 = vector.load %arg1[%c0_1, %c0_2] : memref<1224x384xbf16, #tpu.memory_space<vmem>>, vector<1x128xbf16>
    %c1 = arith.constant 1 : index
    %c0_3 = arith.constant 0 : index
    %2 = vector.load %arg1[%c1, %c0_3] : memref<1224x384xbf16, #tpu.memory_space<vmem>>, vector<1x256xbf16>
    %c2 = arith.constant 2 : index
    %c0_4 = arith.constant 0 : index
    %3 = vector.load %arg1[%c2, %c0_4] : memref<1224x384xbf16, #tpu.memory_space<vmem>>, vector<1x224xbf16>
    %c3 = arith.constant 3 : index
    %c0_5 = arith.constant 0 : index
    %4 = vector.load %arg1[%c3, %c0_5] : memref<1224x384xbf16, #tpu.memory_space<vmem>>, vector<1x64xbf16>
    %c4 = arith.constant 4 : index
    %c0_6 = arith.constant 0 : index
    %5 = vector.load %arg1[%c4, %c0_6] : memref<1224x384xbf16, #tpu.memory_space<vmem>>, vector<1x96xbf16>
    %c5 = arith.constant 5 : index
    %c0_7 = arith.constant 0 : index
    %6 = vector.load %arg1[%c5, %c0_7] : memref<1224x384xbf16, #tpu.memory_space<vmem>>, vector<1x96xbf16>
    %7 = vector.extract_strided_slice %0 {offsets = [0, 0], sizes = [2, 512], strides = [1, 1]} : vector<2x672xf32> to vector<2x512xf32>
    %c8 = arith.constant 8 : index
    %c0_8 = arith.constant 0 : index
    %8 = vector.load %arg1[%c8, %c0_8] : memref<1224x384xbf16, #tpu.memory_space<vmem>>, vector<512x384xbf16>
    %9 = arith.truncf %7 : vector<2x512xf32> to vector<2x512xbf16>
    %cst = arith.constant dense<0.000000e+00> : vector<2x384xf32>
    %10 = tpu.matmul %9, %8, %cst {dimension_numbers = #tpu.dot_dimension_numbers<[1], [0], [0], [1], [0, 0, 1, 1], [], []>} : vector<2x512xbf16>, vector<512x384xbf16>, vector<2x384xf32> -> vector<2x384xf32>
    %11 = vector.extract_strided_slice %10 {offsets = [0, 0], sizes = [2, 128], strides = [1, 1]} : vector<2x384xf32> to vector<2x128xf32>
    %12 = arith.extf %1 : vector<1x128xbf16> to vector<1x128xf32>
    %13 = vector.broadcast %12 : vector<1x128xf32> to vector<2x128xf32>
    %14 = arith.addf %11, %13 : vector<2x128xf32>
    %cst_9 = arith.constant 0.000000e+00 : f32
    %15 = vector.broadcast %cst_9 : f32 to vector<2x128xf32>
    %16 = arith.maximumf %14, %15 : vector<2x128xf32>
    %c520 = arith.constant 520 : index
    %c0_10 = arith.constant 0 : index
    %17 = vector.load %arg1[%c520, %c0_10] : memref<1224x384xbf16, #tpu.memory_space<vmem>>, vector<128x256xbf16>
    %18 = arith.truncf %16 : vector<2x128xf32> to vector<2x128xbf16>
    %cst_11 = arith.constant dense<0.000000e+00> : vector<2x256xf32>
    %19 = tpu.matmul %18, %17, %cst_11 {dimension_numbers = #tpu.dot_dimension_numbers<[1], [0], [0], [1], [0, 0, 1, 1], [], []>} : vector<2x128xbf16>, vector<128x256xbf16>, vector<2x256xf32> -> vector<2x256xf32>
    %20 = vector.extract_strided_slice %10 {offsets = [0, 128], sizes = [2, 256], strides = [1, 1]} : vector<2x384xf32> to vector<2x256xf32>
    %21 = arith.addf %20, %19 : vector<2x256xf32>
    %22 = arith.extf %2 : vector<1x256xbf16> to vector<1x256xf32>
    %23 = vector.broadcast %22 : vector<1x256xf32> to vector<2x256xf32>
    %24 = arith.addf %21, %23 : vector<2x256xf32>
    %cst_12 = arith.constant 0.000000e+00 : f32
    %25 = vector.broadcast %cst_12 : f32 to vector<2x256xf32>
    %26 = arith.maximumf %24, %25 : vector<2x256xf32>
    %c648 = arith.constant 648 : index
    %c0_13 = arith.constant 0 : index
    %27 = vector.load %arg1[%c648, %c0_13] : memref<1224x384xbf16, #tpu.memory_space<vmem>>, vector<256x96xbf16>
    %28 = arith.truncf %26 : vector<2x256xf32> to vector<2x256xbf16>
    %cst_14 = arith.constant dense<0.000000e+00> : vector<2x96xf32>
    %29 = tpu.matmul %28, %27, %cst_14 {dimension_numbers = #tpu.dot_dimension_numbers<[1], [0], [0], [1], [0, 0, 1, 1], [], []>} : vector<2x256xbf16>, vector<256x96xbf16>, vector<2x96xf32> -> vector<2x96xf32>
    %30 = vector.extract_strided_slice %0 {offsets = [0, 512], sizes = [2, 160], strides = [1, 1]} : vector<2x672xf32> to vector<2x160xf32>
    %c904 = arith.constant 904 : index
    %c0_15 = arith.constant 0 : index
    %31 = vector.load %arg1[%c904, %c0_15] : memref<1224x384xbf16, #tpu.memory_space<vmem>>, vector<160x320xbf16>
    %32 = arith.truncf %30 : vector<2x160xf32> to vector<2x160xbf16>
    %cst_16 = arith.constant dense<0.000000e+00> : vector<2x320xf32>
    %33 = tpu.matmul %32, %31, %cst_16 {dimension_numbers = #tpu.dot_dimension_numbers<[1], [0], [0], [1], [0, 0, 1, 1], [], []>} : vector<2x160xbf16>, vector<160x320xbf16>, vector<2x320xf32> -> vector<2x320xf32>
    %34 = vector.extract_strided_slice %33 {offsets = [0, 0], sizes = [2, 128], strides = [1, 1]} : vector<2x320xf32> to vector<2x128xf32>
    %35 = vector.extract_strided_slice %3 {offsets = [0, 0], sizes = [1, 128], strides = [1, 1]} : vector<1x224xbf16> to vector<1x128xbf16>
    %36 = arith.extf %35 : vector<1x128xbf16> to vector<1x128xf32>
    %37 = vector.broadcast %36 : vector<1x128xf32> to vector<2x128xf32>
    %38 = arith.addf %34, %37 : vector<2x128xf32>
    %cst_17 = arith.constant 0.000000e+00 : f32
    %39 = vector.broadcast %cst_17 : f32 to vector<2x128xf32>
    %40 = arith.maximumf %38, %39 : vector<2x128xf32>
    %41 = vector.extract_strided_slice %33 {offsets = [0, 128], sizes = [2, 96], strides = [1, 1]} : vector<2x320xf32> to vector<2x96xf32>
    %42 = vector.extract_strided_slice %3 {offsets = [0, 128], sizes = [1, 96], strides = [1, 1]} : vector<1x224xbf16> to vector<1x96xbf16>
    %43 = arith.extf %42 : vector<1x96xbf16> to vector<1x96xf32>
    %44 = vector.broadcast %43 : vector<1x96xf32> to vector<2x96xf32>
    %45 = arith.addf %41, %44 : vector<2x96xf32>
    %46 = vector.extract_strided_slice %33 {offsets = [0, 224], sizes = [2, 96], strides = [1, 1]} : vector<2x320xf32> to vector<2x96xf32>
    %c1064 = arith.constant 1064 : index
    %c0_18 = arith.constant 0 : index
    %47 = vector.load %arg1[%c1064, %c0_18] : memref<1224x384xbf16, #tpu.memory_space<vmem>>, vector<128x64xbf16>
    %48 = arith.truncf %40 : vector<2x128xf32> to vector<2x128xbf16>
    %cst_19 = arith.constant dense<0.000000e+00> : vector<2x64xf32>
    %49 = tpu.matmul %48, %47, %cst_19 {dimension_numbers = #tpu.dot_dimension_numbers<[1], [0], [0], [1], [0, 0, 1, 1], [], []>} : vector<2x128xbf16>, vector<128x64xbf16>, vector<2x64xf32> -> vector<2x64xf32>
    %50 = arith.extf %4 : vector<1x64xbf16> to vector<1x64xf32>
    %51 = vector.broadcast %50 : vector<1x64xf32> to vector<2x64xf32>
    %52 = arith.addf %49, %51 : vector<2x64xf32>
    %53 = vector.extract_strided_slice %52 {offsets = [0, 0], sizes = [2, 32], strides = [1, 1]} : vector<2x64xf32> to vector<2x32xf32>
    %cst_20 = arith.constant 0.000000e+00 : f32
    %54 = vector.broadcast %cst_20 : f32 to vector<2x32xf32>
    %55 = arith.maximumf %53, %54 : vector<2x32xf32>
    %56 = vector.extract_strided_slice %52 {offsets = [0, 32], sizes = [2, 32], strides = [1, 1]} : vector<2x64xf32> to vector<2x32xf32>
    %57 = vector.extract_strided_slice %52 {offsets = [0, 33], sizes = [2, 1], strides = [1, 1]} : vector<2x64xf32> to vector<2x1xf32>
    %58 = arith.negf %57 : vector<2x1xf32>
    %59 = math.exp %58 : vector<2x1xf32>
    %cst_21 = arith.constant 1.000000e+00 : f32
    %60 = vector.broadcast %cst_21 : f32 to vector<2x1xf32>
    %61 = arith.addf %60, %59 : vector<2x1xf32>
    %62 = arith.divf %60, %61 : vector<2x1xf32>
    %c1192 = arith.constant 1192 : index
    %c0_22 = arith.constant 0 : index
    %63 = vector.load %arg1[%c1192, %c0_22] : memref<1224x384xbf16, #tpu.memory_space<vmem>>, vector<32x96xbf16>
    %64 = arith.truncf %55 : vector<2x32xf32> to vector<2x32xbf16>
    %cst_23 = arith.constant dense<0.000000e+00> : vector<2x96xf32>
    %65 = tpu.matmul %64, %63, %cst_23 {dimension_numbers = #tpu.dot_dimension_numbers<[1], [0], [0], [1], [0, 0, 1, 1], [], []>} : vector<2x32xbf16>, vector<32x96xbf16>, vector<2x96xf32> -> vector<2x96xf32>
    %66 = vector.extract_strided_slice %0 {offsets = [0, 608], sizes = [2, 32], strides = [1, 1]} : vector<2x672xf32> to vector<2x32xf32>
    %67 = arith.addf %29, %65 : vector<2x96xf32>
    %68 = arith.addf %67, %46 : vector<2x96xf32>
    %69 = arith.extf %6 : vector<1x96xbf16> to vector<1x96xf32>
    %70 = vector.broadcast %62 : vector<2x1xf32> to vector<2x96xf32>
    %71 = vector.broadcast %69 : vector<1x96xf32> to vector<2x96xf32>
    %72 = arith.mulf %70, %71 : vector<2x96xf32>
    %73 = arith.addf %68, %72 : vector<2x96xf32>
    %74 = arith.extf %5 : vector<1x96xbf16> to vector<1x96xf32>
    %75 = vector.broadcast %74 : vector<1x96xf32> to vector<2x96xf32>
    %76 = arith.addf %73, %75 : vector<2x96xf32>
    %77 = vector.extract_strided_slice %76 {offsets = [0, 0], sizes = [2, 32], strides = [1, 1]} : vector<2x96xf32> to vector<2x32xf32>
    %78 = vector.extract_strided_slice %45 {offsets = [0, 0], sizes = [2, 32], strides = [1, 1]} : vector<2x96xf32> to vector<2x32xf32>
    %79 = arith.addf %77, %78 : vector<2x32xf32>
    %80 = arith.negf %79 : vector<2x32xf32>
    %81 = math.exp %80 : vector<2x32xf32>
    %cst_24 = arith.constant 1.000000e+00 : f32
    %82 = vector.broadcast %cst_24 : f32 to vector<2x32xf32>
    %83 = arith.addf %82, %81 : vector<2x32xf32>
    %84 = arith.divf %82, %83 : vector<2x32xf32>
    %85 = vector.extract_strided_slice %76 {offsets = [0, 32], sizes = [2, 32], strides = [1, 1]} : vector<2x96xf32> to vector<2x32xf32>
    %86 = vector.extract_strided_slice %45 {offsets = [0, 32], sizes = [2, 32], strides = [1, 1]} : vector<2x96xf32> to vector<2x32xf32>
    %87 = arith.addf %85, %86 : vector<2x32xf32>
    %88 = arith.negf %87 : vector<2x32xf32>
    %89 = math.exp %88 : vector<2x32xf32>
    %cst_25 = arith.constant 1.000000e+00 : f32
    %90 = vector.broadcast %cst_25 : f32 to vector<2x32xf32>
    %91 = arith.addf %90, %89 : vector<2x32xf32>
    %92 = arith.divf %90, %91 : vector<2x32xf32>
    %93 = vector.extract_strided_slice %76 {offsets = [0, 64], sizes = [2, 32], strides = [1, 1]} : vector<2x96xf32> to vector<2x32xf32>
    %94 = vector.extract_strided_slice %45 {offsets = [0, 64], sizes = [2, 32], strides = [1, 1]} : vector<2x96xf32> to vector<2x32xf32>
    %95 = arith.mulf %84, %94 : vector<2x32xf32>
    %96 = arith.addf %93, %95 : vector<2x32xf32>
    %97 = math.tanh %96 : vector<2x32xf32>
    %cst_26 = arith.constant 1.000000e+00 : f32
    %98 = vector.broadcast %cst_26 : f32 to vector<2x32xf32>
    %99 = arith.subf %98, %92 : vector<2x32xf32>
    %100 = arith.mulf %99, %97 : vector<2x32xf32>
    %101 = arith.mulf %92, %66 : vector<2x32xf32>
    %102 = arith.addf %100, %101 : vector<2x32xf32>
    %cst_27 = arith.constant 0.000000e+00 : f32
    %103 = vector.broadcast %cst_27 : f32 to vector<2x64xf32>
    %104 = tpu.concatenate %102, %56, %103 in 1 : vector<2x32xf32>, vector<2x32xf32>, vector<2x64xf32> -> vector<2x128xf32>
    %c0_28 = arith.constant 0 : index
    %c0_29 = arith.constant 0 : index
    %105 = vector.load %arg2[%c0_28, %c0_29] : memref<2x128xf32, #tpu.memory_space<vmem>>, vector<2x128xf32>
    tpu.vector_store %arg2[%c0_28, %c0_29], %104 {strides = array<i32>} : memref<2x128xf32, #tpu.memory_space<vmem>>, vector<2x128xf32>,
    return
  }
}

</mosaic_0001>

<llo_original>
// kernel: tsgm_forward.1
$region0: #{tsgm_forward.1}
  #allocation0 [shape = 'u32[]', space=smem, size = 0x4, offset = 0x4, fixed_abs, tag = 'smem constant byte address 0x4 - core index']
  #allocation1 [shape = 'u32[144,128]{1,0:T(1,128)}', space=vmem, size = 0x12000, scoped, tag = 'internal scratch']
  %s0 = inlined_call_operand.vmem [shape: f32[2,672], index: 0, kind: input, shape index: {}]
  %s1 = inlined_call_operand.hbm [shape: bf16[1224,384], index: 1, kind: input, shape index: {}]
  %s2 = inlined_call_operand.vmem [shape: f32[2,128], index: 2, kind: output, shape index: {}]
  %s3 = sld [smem:[#allocation0]]
  $region22: #{tsgm_forward.1} parent=0
    _
  %s5 = ssub.s32 1, %s3
  %s6 = scalar_select 0, %s5, %s3
  $region1: #{tsgm_forward.1} parent=0
    #allocation2 [shape = 'u8[940032]{0}', space=vmem, size = 0xe5800, scoped, tag = 'input window, operand 1, single buffered']
    #allocation3 [shape = 's32[1]{0}', space=sflag, size = 0x4, scoped, tag = 'scoped memory for tsgm_forward.1']
    %7 = vsyncpa [#allocation3], 0
    // Predicated region
    $region2: #{tsgm_forward.1} parent=1 // pred_check
      _
    $region3: #{tsgm_forward.1} parent=1 // pred_check_branch
      %9 = sbr.rel (0) target = $region5
    $region4: #{tsgm_forward.1} parent=1 // pred_region
      _
    $region5: #{tsgm_forward.1} parent=1 // pred_fallthru
      _
    // Predicated region
    $region6: #{tsgm_forward.1} parent=1 // pred_check
      _
    $region7: #{tsgm_forward.1} parent=1 // pred_check_branch
      %11 = sbr.rel (0) target = $region9
    $region8: #{tsgm_forward.1} parent=1 // pred_region
      %s13 = ssub.s32 29376, 29376
      %14 = vsyncadd [#allocation3], %s13
      %s15 = sshll.u32 [#allocation2], 4
      %s16 = int_to_ptr.vmem [resolvable:$true] %s15
      %21 = dma.hbm_to_vmem [thread:$0]  %s1, 29376, %s16, [#allocation3], 192, 192, 12
    $region9: #{tsgm_forward.1} parent=1 // pred_fallthru
      _
    // Predicated region
    $region10: #{tsgm_forward.1} parent=1 // pred_check
      _
    $region11: #{tsgm_forward.1} parent=1 // pred_check_branch
      %23 = sbr.rel (0) target = $region13
    $region12: #{tsgm_forward.1} parent=1 // pred_region
      %24 = dma.done [#allocation3], 29376
    $region13: #{tsgm_forward.1} parent=1 // pred_fallthru
      _
    %v26 = vld [vmem:[%s0] sm:$0xff]
    %v27 = vld [vmem:[%s0 + $0x8] sm:$0xf]
    %v28 = vld [vmem:[#allocation2] sm:$0x1]
    %v29 = vld [vmem:[#allocation2] sm:$0x11]
    %v30 = vld [vmem:[#allocation2] sm:$0x22]
    %v31 = vld [vmem:[#allocation2] sm:$0x2]
    %v32 = vld [vmem:[#allocation2] sm:$0x4]
    %v33 = vld [vmem:[#allocation2 + $0xc] sm:$0xff]
    %v34 = vld [vmem:[#allocation2 + $0x14] sm:$0xf]
    %v35 = vld [vmem:[#allocation2 + $0x18] sm:$0xff]
    %v36 = vld [vmem:[#allocation2 + $0x20] sm:$0xf]
    %v37 = vld [vmem:[#allocation2 + $0x24] sm:$0xff]
    %v38 = vld [vmem:[#allocation2 + $0x2c] sm:$0xf]
    %v39 = vld [vmem:[#allocation2 + $0x30] sm:$0xff]
    %v40 = vld [vmem:[#allocation2 + $0x38] sm:$0xf]
    %v41 = vld [vmem:[#allocation2 + $0x3c] sm:$0xff]
    %v42 = vld [vmem:[#allocation2 + $0x44] sm:$0xf]
    %v43 = vld [vmem:[#allocation2 + $0x48] sm:$0xff]
    %v44 = vld [vmem:[#allocation2 + $0x50] sm:$0xf]
    %v45 = vld [vmem:[#allocation2 + $0x54] sm:$0xff]
    %v46 = vld [vmem:[#allocation2 + $0x5c] sm:$0xf]
    %v47 = vld [vmem:[#allocation2 + $0x60] sm:$0xff]
    %v48 = vld [vmem:[#allocation2 + $0x68] sm:$0xf]
    %v49 = vld [vmem:[#allocation2 + $0x6c] sm:$0xff]
    %v50 = vld [vmem:[#allocation2 + $0x74] sm:$0xf]
    %v51 = vld [vmem:[#allocation2 + $0x78] sm:$0xff]
    %v52 = vld [vmem:[#allocation2 + $0x80] sm:$0xf]
    %v53 = vld [vmem:[#allocation2 + $0x84] sm:$0xff]
    %v54 = vld [vmem:[#allocation2 + $0x8c] sm:$0xf]
    %v55 = vld [vmem:[#allocation2 + $0x90] sm:$0xff]
    %v56 = vld [vmem:[#allocation2 + $0x98] sm:$0xf]
    %v57 = vld [vmem:[#allocation2 + $0x9c] sm:$0xff]
    %v58 = vld [vmem:[#allocation2 + $0xa4] sm:$0xf]
    %v59 = vld [vmem:[#allocation2 + $0xa8] sm:$0xff]
    %v60 = vld [vmem:[#allocation2 + $0xb0] sm:$0xf]
    %v61 = vld [vmem:[#allocation2 + $0xb4] sm:$0xff]
    %v62 = vld [vmem:[#allocation2 + $0xbc] sm:$0xf]
    %v63 = vld [vmem:[#allocation2 + $0xc0] sm:$0xff]
    %v64 = vld [vmem:[#allocation2 + $0xc8] sm:$0xf]
    %v65 = vld [vmem:[#allocation2 + $0xcc] sm:$0xff]
    %v66 = vld [vmem:[#allocation2 + $0xd4] sm:$0xf]
    %v67 = vld [vmem:[#allocation2 + $0xd8] sm:$0xff]
    %v68 = vld [vmem:[#allocation2 + $0xe0] sm:$0xf]
    %v69 = vld [vmem:[#allocation2 + $0xe4] sm:$0xff]
    %v70 = vld [vmem:[#allocation2 + $0xec] sm:$0xf]
    %v71 = vld [vmem:[#allocation2 + $0xf0] sm:$0xff]
    %v72 = vld [vmem:[#allocation2 + $0xf8] sm:$0xf]
    %v73 = vld [vmem:[#allocation2 + $0xfc] sm:$0xff]
    %v74 = vld [vmem:[#allocation2 + $0x104] sm:$0xf]
    %v75 = vld [vmem:[#allocation2 + $0x108] sm:$0xff]
    %v76 = vld [vmem:[#allocation2 + $0x110] sm:$0xf]
    %v77 = vld [vmem:[#allocation2 + $0x114] sm:$0xff]
    %v78 = vld [vmem:[#allocation2 + $0x11c] sm:$0xf]
    %v79 = vld [vmem:[#allocation2 + $0x120] sm:$0xff]
    %v80 = vld [vmem:[#allocation2 + $0x128] sm:$0xf]
    %v81 = vld [vmem:[#allocation2 + $0x12c] sm:$0xff]
    %v82 = vld [vmem:[#allocation2 + $0x134] sm:$0xf]
    %v83 = vld [vmem:[#allocation2 + $0x138] sm:$0xff]
    %v84 = vld [vmem:[#allocation2 + $0x140] sm:$0xf]
    %v85 = vld [vmem:[#allocation2 + $0x144] sm:$0xff]
    %v86 = vld [vmem:[#allocation2 + $0x14c] sm:$0xf]
    %v87 = vld [vmem:[#allocation2 + $0x150] sm:$0xff]
    %v88 = vld [vmem:[#allocation2 + $0x158] sm:$0xf]
    %v89 = vld [vmem:[#allocation2 + $0x15c] sm:$0xff]
    %v90 = vld [vmem:[#allocation2 + $0x164] sm:$0xf]
    %v91 = vld [vmem:[#allocation2 + $0x168] sm:$0xff]
    %v92 = vld [vmem:[#allocation2 + $0x170] sm:$0xf]
    %v93 = vld [vmem:[#allocation2 + $0x174] sm:$0xff]
    %v94 = vld [vmem:[#allocation2 + $0x17c] sm:$0xf]
    %v95 = vld [vmem:[#allocation2 + $0x180] sm:$0xff]
    %v96 = vld [vmem:[#allocation2 + $0x188] sm:$0xf]
    %v97 = vld [vmem:[#allocation2 + $0x18c] sm:$0xff]
    %v98 = vld [vmem:[#allocation2 + $0x194] sm:$0xf]
    %v99 = vld [vmem:[#allocation2 + $0x198] sm:$0xff]
    %v100 = vld [vmem:[#allocation2 + $0x1a0] sm:$0xf]
    %v101 = vld [vmem:[#allocation2 + $0x1a4] sm:$0xff]
    %v102 = vld [vmem:[#allocation2 + $0x1ac] sm:$0xf]
    %v103 = vld [vmem:[#allocation2 + $0x1b0] sm:$0xff]
    %v104 = vld [vmem:[#allocation2 + $0x1b8] sm:$0xf]
    %v105 = vld [vmem:[#allocation2 + $0x1bc] sm:$0xff]
    %v106 = vld [vmem:[#allocation2 + $0x1c4] sm:$0xf]
    %v107 = vld [vmem:[#allocation2 + $0x1c8] sm:$0xff]
    %v108 = vld [vmem:[#allocation2 + $0x1d0] sm:$0xf]
    %v109 = vld [vmem:[#allocation2 + $0x1d4] sm:$0xff]
    %v110 = vld [vmem:[#allocation2 + $0x1dc] sm:$0xf]
    %v111 = vld [vmem:[#allocation2 + $0x1e0] sm:$0xff]
    %v112 = vld [vmem:[#allocation2 + $0x1e8] sm:$0xf]
    %v113 = vld [vmem:[#allocation2 + $0x1ec] sm:$0xff]
    %v114 = vld [vmem:[#allocation2 + $0x1f4] sm:$0xf]
    %v115 = vld [vmem:[#allocation2 + $0x1f8] sm:$0xff]
    %v116 = vld [vmem:[#allocation2 + $0x200] sm:$0xf]
    %v117 = vld [vmem:[#allocation2 + $0x204] sm:$0xff]
    %v118 = vld [vmem:[#allocation2 + $0x20c] sm:$0xf]
    %v119 = vld [vmem:[#allocation2 + $0x210] sm:$0xff]
    %v120 = vld [vmem:[#allocation2 + $0x218] sm:$0xf]
    %v121 = vld [vmem:[#allocation2 + $0x21c] sm:$0xff]
    %v122 = vld [vmem:[#allocation2 + $0x224] sm:$0xf]
    %v123 = vld [vmem:[#allocation2 + $0x228] sm:$0xff]
    %v124 = vld [vmem:[#allocation2 + $0x230] sm:$0xf]
    %v125 = vld [vmem:[#allocation2 + $0x234] sm:$0xff]
    %v126 = vld [vmem:[#allocation2 + $0x23c] sm:$0xf]
    %v127 = vld [vmem:[#allocation2 + $0x240] sm:$0xff]
    %v128 = vld [vmem:[#allocation2 + $0x248] sm:$0xf]
    %v129 = vld [vmem:[#allocation2 + $0x24c] sm:$0xff]
    %v130 = vld [vmem:[#allocation2 + $0x254] sm:$0xf]
    %v131 = vld [vmem:[#allocation2 + $0x258] sm:$0xff]
    %v132 = vld [vmem:[#allocation2 + $0x260] sm:$0xf]
    %v133 = vld [vmem:[#allocation2 + $0x264] sm:$0xff]
    %v134 = vld [vmem:[#allocation2 + $0x26c] sm:$0xf]
    %v135 = vld [vmem:[#allocation2 + $0x270] sm:$0xff]
    %v136 = vld [vmem:[#allocation2 + $0x278] sm:$0xf]
    %v137 = vld [vmem:[#allocation2 + $0x27c] sm:$0xff]
    %v138 = vld [vmem:[#allocation2 + $0x284] sm:$0xf]
    %v139 = vld [vmem:[#allocation2 + $0x288] sm:$0xff]
    %v140 = vld [vmem:[#allocation2 + $0x290] sm:$0xf]
    %v141 = vld [vmem:[#allocation2 + $0x294] sm:$0xff]
    %v142 = vld [vmem:[#allocation2 + $0x29c] sm:$0xf]
    %v143 = vld [vmem:[#allocation2 + $0x2a0] sm:$0xff]
    %v144 = vld [vmem:[#allocation2 + $0x2a8] sm:$0xf]
    %v145 = vld [vmem:[#allocation2 + $0x2ac] sm:$0xff]
    %v146 = vld [vmem:[#allocation2 + $0x2b4] sm:$0xf]
    %v147 = vld [vmem:[#allocation2 + $0x2b8] sm:$0xff]
    %v148 = vld [vmem:[#allocation2 + $0x2c0] sm:$0xf]
    %v149 = vld [vmem:[#allocation2 + $0x2c4] sm:$0xff]
    %v150 = vld [vmem:[#allocation2 + $0x2cc] sm:$0xf]
    %v151 = vld [vmem:[#allocation2 + $0x2d0] sm:$0xff]
    %v152 = vld [vmem:[#allocation2 + $0x2d8] sm:$0xf]
    %v153 = vld [vmem:[#allocation2 + $0x2dc] sm:$0xff]
    %v154 = vld [vmem:[#allocation2 + $0x2e4] sm:$0xf]
    %v155 = vld [vmem:[#allocation2 + $0x2e8] sm:$0xff]
    %v156 = vld [vmem:[#allocation2 + $0x2f0] sm:$0xf]
    %v157 = vld [vmem:[#allocation2 + $0x2f4] sm:$0xff]
    %v158 = vld [vmem:[#allocation2 + $0x2fc] sm:$0xf]
    %v159 = vld [vmem:[#allocation2 + $0x300] sm:$0xff]
    %v160 = vld [vmem:[#allocation2 + $0x308] sm:$0xf]
    %v162 = vcombine.high %v26, %v26
    %v164 = vunpack.c.l.s4 1983009808
    %v165 = vunpack.c.0.s8 %v164
    %v166 = vlaneseq
    %v167 = vshrl.u32 %v166, 7
    %v168 = vsub.s32 %v165, %v167
    %v169 = vrot.slane %v26, %v168
    %v171 = vunpack.c.l.s4 1983009808
    %v172 = vunpack.c.0.s8 %v171
    %v173 = vlaneseq
    %v174 = vshrl.u32 %v173, 7
    %v175 = vsub.s32 %v172, %v174
    %v176 = vrot.slane %v162, %v175
    %v177 = vcombine.high %v169, %v169
    %v178 = vcombine.high %v176, %v176
    %v183 = vpack.c.bf16 %v169, %v169
    %v184 = vpack.c.bf16 %v177, %v177
    %v185 = vpack.c.bf16 %v176, %v176
    %v186 = vpack.c.bf16 %v178, %v178
    %v315 = vunpack.c.l.b16 %v33
    %v316 = vunpack.c.h.b16 %v33
    %v317 = vunpack.c.l.b16 %v34
    %v318 = vunpack.c.l.b16 %v35
    %v319 = vunpack.c.h.b16 %v35
    %v320 = vunpack.c.l.b16 %v36
    %v321 = vunpack.c.l.b16 %v37
    %v322 = vunpack.c.h.b16 %v37
    %v323 = vunpack.c.l.b16 %v38
    %v324 = vunpack.c.l.b16 %v39
    %v325 = vunpack.c.h.b16 %v39
    %v326 = vunpack.c.l.b16 %v40
    %v327 = vunpack.c.l.b16 %v41
    %v328 = vunpack.c.h.b16 %v41
    %v329 = vunpack.c.l.b16 %v42
    %v330 = vunpack.c.l.b16 %v43
    %v331 = vunpack.c.h.b16 %v43
    %v332 = vunpack.c.l.b16 %v44
    %v333 = vunpack.c.l.b16 %v45
    %v334 = vunpack.c.h.b16 %v45
    %v335 = vunpack.c.l.b16 %v46
    %v336 = vunpack.c.l.b16 %v47
    %v337 = vunpack.c.h.b16 %v47
    %v338 = vunpack.c.l.b16 %v48
    %v339 = vunpack.c.l.b16 %v49
    %v340 = vunpack.c.h.b16 %v49
    %v341 = vunpack.c.l.b16 %v50
    %v342 = vunpack.c.l.b16 %v51
    %v343 = vunpack.c.h.b16 %v51
    %v344 = vunpack.c.l.b16 %v52
    %v345 = vunpack.c.l.b16 %v53
    %v346 = vunpack.c.h.b16 %v53
    %v347 = vunpack.c.l.b16 %v54
    %v348 = vunpack.c.l.b16 %v55
    %v349 = vunpack.c.h.b16 %v55
    %v350 = vunpack.c.l.b16 %v56
    %v351 = vunpack.c.l.b16 %v57
    %v352 = vunpack.c.h.b16 %v57
    %v353 = vunpack.c.l.b16 %v58
    %v354 = vunpack.c.l.b16 %v59
    %v355 = vunpack.c.h.b16 %v59
    %v356 = vunpack.c.l.b16 %v60
    %v357 = vunpack.c.l.b16 %v61
    %v358 = vunpack.c.h.b16 %v61
    %v359 = vunpack.c.l.b16 %v62
    %v360 = vunpack.c.l.b16 %v63
    %v361 = vunpack.c.h.b16 %v63
    %v362 = vunpack.c.l.b16 %v64
    %v363 = vunpack.c.l.b16 %v65
    %v364 = vunpack.c.h.b16 %v65
    %v365 = vunpack.c.l.b16 %v66
    %v366 = vunpack.c.l.b16 %v67
    %v367 = vunpack.c.h.b16 %v67
    %v368 = vunpack.c.l.b16 %v68
    %v369 = vunpack.c.l.b16 %v69
    %v370 = vunpack.c.h.b16 %v69
    %v371 = vunpack.c.l.b16 %v70
    %v372 = vunpack.c.l.b16 %v71
    %v373 = vunpack.c.h.b16 %v71
    %v374 = vunpack.c.l.b16 %v72
    %v375 = vunpack.c.l.b16 %v73
    %v376 = vunpack.c.h.b16 %v73
    %v377 = vunpack.c.l.b16 %v74
    %v378 = vunpack.c.l.b16 %v75
    %v379 = vunpack.c.h.b16 %v75
    %v380 = vunpack.c.l.b16 %v76
    %v381 = vunpack.c.l.b16 %v77
    %v382 = vunpack.c.h.b16 %v77
    %v383 = vunpack.c.l.b16 %v78
    %v384 = vunpack.c.l.b16 %v79
    %v385 = vunpack.c.h.b16 %v79
    %v386 = vunpack.c.l.b16 %v80
    %v387 = vunpack.c.l.b16 %v81
    %v388 = vunpack.c.h.b16 %v81
    %v389 = vunpack.c.l.b16 %v82
    %v390 = vunpack.c.l.b16 %v83
    %v391 = vunpack.c.h.b16 %v83
    %v392 = vunpack.c.l.b16 %v84
    %v393 = vunpack.c.l.b16 %v85
    %v394 = vunpack.c.h.b16 %v85
    %v395 = vunpack.c.l.b16 %v86
    %v396 = vunpack.c.l.b16 %v87
    %v397 = vunpack.c.h.b16 %v87
    %v398 = vunpack.c.l.b16 %v88
    %v399 = vunpack.c.l.b16 %v89
    %v400 = vunpack.c.h.b16 %v89
    %v401 = vunpack.c.l.b16 %v90
    %v402 = vunpack.c.l.b16 %v91
    %v403 = vunpack.c.h.b16 %v91
    %v404 = vunpack.c.l.b16 %v92
    %v405 = vunpack.c.l.b16 %v93
    %v406 = vunpack.c.h.b16 %v93
    %v407 = vunpack.c.l.b16 %v94
    %v408 = vunpack.c.l.b16 %v95
    %v409 = vunpack.c.h.b16 %v95
    %v410 = vunpack.c.l.b16 %v96
    %v411 = vunpack.c.l.b16 %v97
    %v412 = vunpack.c.h.b16 %v97
    %v413 = vunpack.c.l.b16 %v98
    %v414 = vunpack.c.l.b16 %v99
    %v415 = vunpack.c.h.b16 %v99
    %v416 = vunpack.c.l.b16 %v100
    %v417 = vunpack.c.l.b16 %v101
    %v418 = vunpack.c.h.b16 %v101
    %v419 = vunpack.c.l.b16 %v102
    %v420 = vunpack.c.l.b16 %v103
    %v421 = vunpack.c.h.b16 %v103
    %v422 = vunpack.c.l.b16 %v104
    %v423 = vunpack.c.l.b16 %v105
    %v424 = vunpack.c.h.b16 %v105
    %v425 = vunpack.c.l.b16 %v106
    %v426 = vunpack.c.l.b16 %v107
    %v427 = vunpack.c.h.b16 %v107
    %v428 = vunpack.c.l.b16 %v108
    %v429 = vunpack.c.l.b16 %v109
    %v430 = vunpack.c.h.b16 %v109
    %v431 = vunpack.c.l.b16 %v110
    %v432 = vunpack.c.l.b16 %v111
    %v433 = vunpack.c.h.b16 %v111
    %v434 = vunpack.c.l.b16 %v112
    %v435 = vunpack.c.l.b16 %v113
    %v436 = vunpack.c.h.b16 %v113
    %v437 = vunpack.c.l.b16 %v114
    %v438 = vunpack.c.l.b16 %v115
    %v439 = vunpack.c.h.b16 %v115
    %v440 = vunpack.c.l.b16 %v116
    %v441 = vunpack.c.l.b16 %v117
    %v442 = vunpack.c.h.b16 %v117
    %v443 = vunpack.c.l.b16 %v118
    %v444 = vunpack.c.l.b16 %v119
    %v445 = vunpack.c.h.b16 %v119
    %v446 = vunpack.c.l.b16 %v120
    %v447 = vunpack.c.l.b16 %v121
    %v448 = vunpack.c.h.b16 %v121
    %v449 = vunpack.c.l.b16 %v122
    %v450 = vunpack.c.l.b16 %v123
    %v451 = vunpack.c.h.b16 %v123
    %v452 = vunpack.c.l.b16 %v124
    %v453 = vunpack.c.l.b16 %v125
    %v454 = vunpack.c.h.b16 %v125
    %v455 = vunpack.c.l.b16 %v126
    %v456 = vunpack.c.l.b16 %v127
    %v457 = vunpack.c.h.b16 %v127
    %v458 = vunpack.c.l.b16 %v128
    %v459 = vunpack.c.l.b16 %v129
    %v460 = vunpack.c.h.b16 %v129
    %v461 = vunpack.c.l.b16 %v130
    %v462 = vunpack.c.l.b16 %v131
    %v463 = vunpack.c.h.b16 %v131
    %v464 = vunpack.c.l.b16 %v132
    %v465 = vunpack.c.l.b16 %v133
    %v466 = vunpack.c.h.b16 %v133
    %v467 = vunpack.c.l.b16 %v134
    %v468 = vunpack.c.l.b16 %v135
    %v469 = vunpack.c.h.b16 %v135
    %v470 = vunpack.c.l.b16 %v136
    %v471 = vunpack.c.l.b16 %v137
    %v472 = vunpack.c.h.b16 %v137
    %v473 = vunpack.c.l.b16 %v138
    %v474 = vunpack.c.l.b16 %v139
    %v475 = vunpack.c.h.b16 %v139
    %v476 = vunpack.c.l.b16 %v140
    %v477 = vunpack.c.l.b16 %v141
    %v478 = vunpack.c.h.b16 %v141
    %v479 = vunpack.c.l.b16 %v142
    %v480 = vunpack.c.l.b16 %v143
    %v481 = vunpack.c.h.b16 %v143
    %v482 = vunpack.c.l.b16 %v144
    %v483 = vunpack.c.l.b16 %v145
    %v484 = vunpack.c.h.b16 %v145
    %v485 = vunpack.c.l.b16 %v146
    %v486 = vunpack.c.l.b16 %v147
    %v487 = vunpack.c.h.b16 %v147
    %v488 = vunpack.c.l.b16 %v148
    %v489 = vunpack.c.l.b16 %v149
    %v490 = vunpack.c.h.b16 %v149
    %v491 = vunpack.c.l.b16 %v150
    %v492 = vunpack.c.l.b16 %v151
    %v493 = vunpack.c.h.b16 %v151
    %v494 = vunpack.c.l.b16 %v152
    %v495 = vunpack.c.l.b16 %v153
    %v496 = vunpack.c.h.b16 %v153
    %v497 = vunpack.c.l.b16 %v154
    %v498 = vunpack.c.l.b16 %v155
    %v499 = vunpack.c.h.b16 %v155
    %v500 = vunpack.c.l.b16 %v156
    %v501 = vunpack.c.l.b16 %v157
    %v502 = vunpack.c.h.b16 %v157
    %v503 = vunpack.c.l.b16 %v158
    %v504 = vunpack.c.l.b16 %v159
    %v505 = vunpack.c.h.b16 %v159
    %v506 = vunpack.c.l.b16 %v160
    %v507 = vpack.c.b16 %v318, %v315
    %v508 = vpack.c.b16 %v319, %v316
    %v509 = vpack.c.b16 %v320, %v317
    %v510 = vpack.c.b16 %v324, %v321
    %v511 = vpack.c.b16 %v325, %v322
    %v512 = vpack.c.b16 %v326, %v323
    %v513 = vpack.c.b16 %v330, %v327
    %v514 = vpack.c.b16 %v331, %v328
    %v515 = vpack.c.b16 %v332, %v329
    %v516 = vpack.c.b16 %v336, %v333
    %v517 = vpack.c.b16 %v337, %v334
    %v518 = vpack.c.b16 %v338, %v335
    %v519 = vpack.c.b16 %v342, %v339
    %v520 = vpack.c.b16 %v343, %v340
    %v521 = vpack.c.b16 %v344, %v341
    %v522 = vpack.c.b16 %v348, %v345
    %v523 = vpack.c.b16 %v349, %v346
    %v524 = vpack.c.b16 %v350, %v347
    %v525 = vpack.c.b16 %v354, %v351
    %v526 = vpack.c.b16 %v355, %v352
    %v527 = vpack.c.b16 %v356, %v353
    %v528 = vpack.c.b16 %v360, %v357
    %v529 = vpack.c.b16 %v361, %v358
    %v530 = vpack.c.b16 %v362, %v359
    %v531 = vpack.c.b16 %v366, %v363
    %v532 = vpack.c.b16 %v367, %v364
    %v533 = vpack.c.b16 %v368, %v365
    %v534 = vpack.c.b16 %v372, %v369
    %v535 = vpack.c.b16 %v373, %v370
    %v536 = vpack.c.b16 %v374, %v371
    %v537 = vpack.c.b16 %v378, %v375
    %v538 = vpack.c.b16 %v379, %v376
    %v539 = vpack.c.b16 %v380, %v377
    %v540 = vpack.c.b16 %v384, %v381
    %v541 = vpack.c.b16 %v385, %v382
    %v542 = vpack.c.b16 %v386, %v383
    %v543 = vpack.c.b16 %v390, %v387
    %v544 = vpack.c.b16 %v391, %v388
    %v545 = vpack.c.b16 %v392, %v389
    %v546 = vpack.c.b16 %v396, %v393
    %v547 = vpack.c.b16 %v397, %v394
    %v548 = vpack.c.b16 %v398, %v395
    %v549 = vpack.c.b16 %v402, %v399
    %v550 = vpack.c.b16 %v403, %v400
    %v551 = vpack.c.b16 %v404, %v401
    %v552 = vpack.c.b16 %v408, %v405
    %v553 = vpack.c.b16 %v409, %v406
    %v554 = vpack.c.b16 %v410, %v407
    %v555 = vpack.c.b16 %v414, %v411
    %v556 = vpack.c.b16 %v415, %v412
    %v557 = vpack.c.b16 %v416, %v413
    %v558 = vpack.c.b16 %v420, %v417
    %v559 = vpack.c.b16 %v421, %v418
    %v560 = vpack.c.b16 %v422, %v419
    %v561 = vpack.c.b16 %v426, %v423
    %v562 = vpack.c.b16 %v427, %v424
    %v563 = vpack.c.b16 %v428, %v425
    %v564 = vpack.c.b16 %v432, %v429
    %v565 = vpack.c.b16 %v433, %v430
    %v566 = vpack.c.b16 %v434, %v431
    %v567 = vpack.c.b16 %v438, %v435
    %v568 = vpack.c.b16 %v439, %v436
    %v569 = vpack.c.b16 %v440, %v437
    %v570 = vpack.c.b16 %v444, %v441
    %v571 = vpack.c.b16 %v445, %v442
    %v572 = vpack.c.b16 %v446, %v443
    %v573 = vpack.c.b16 %v450, %v447
    %v574 = vpack.c.b16 %v451, %v448
    %v575 = vpack.c.b16 %v452, %v449
    %v576 = vpack.c.b16 %v456, %v453
    %v577 = vpack.c.b16 %v457, %v454
    %v578 = vpack.c.b16 %v458, %v455
    %v579 = vpack.c.b16 %v462, %v459
    %v580 = vpack.c.b16 %v463, %v460
    %v581 = vpack.c.b16 %v464, %v461
    %v582 = vpack.c.b16 %v468, %v465
    %v583 = vpack.c.b16 %v469, %v466
    %v584 = vpack.c.b16 %v470, %v467
    %v585 = vpack.c.b16 %v474, %v471
    %v586 = vpack.c.b16 %v475, %v472
    %v587 = vpack.c.b16 %v476, %v473
    %v588 = vpack.c.b16 %v480, %v477
    %v589 = vpack.c.b16 %v481, %v478
    %v590 = vpack.c.b16 %v482, %v479
    %v591 = vpack.c.b16 %v486, %v483
    %v592 = vpack.c.b16 %v487, %v484
    %v593 = vpack.c.b16 %v488, %v485
    %v594 = vpack.c.b16 %v492, %v489
    %v595 = vpack.c.b16 %v493, %v490
    %v596 = vpack.c.b16 %v494, %v491
    %v597 = vpack.c.b16 %v498, %v495
    %v598 = vpack.c.b16 %v499, %v496
    %v599 = vpack.c.b16 %v500, %v497
    %v600 = vpack.c.b16 %v504, %v501
    %v601 = vpack.c.b16 %v505, %v502
    %v602 = vpack.c.b16 %v506, %v503
    %699 = vmatprep.subr.bf16.mxu0 %v508
    %700 = vmatpush1.bf16.msra.mxu0 %v507
    %701 = vmatprep.subr.bf16.mxu0 %v511
    %702 = vmatpush1.bf16.msra.mxu0 %v510
    %703 = vmatprep.subr.bf16.mxu0 %v514
    %704 = vmatpush1.bf16.msra.mxu0 %v513
    %705 = vmatprep.subr.bf16.mxu0 %v517
    %706 = vmatpush1.bf16.msra.mxu0 %v516
    %707 = vmatprep.subr.bf16.mxu0 %v520
    %708 = vmatpush1.bf16.msra.mxu0 %v519
    %709 = vmatprep.subr.bf16.mxu0 %v523
    %710 = vmatpush1.bf16.msra.mxu0 %v522
    %711 = vmatprep.subr.bf16.mxu0 %v526
    %712 = vmatpush1.bf16.msra.mxu0 %v525
    %713 = vmatprep.subr.bf16.mxu0 %v529
    %714 = vmatpush1.bf16.msra.mxu0 %v528
    %715 = vmatprep.subr.bf16.mxu0 %v532
    %716 = vmatpush1.bf16.msra.mxu0 %v531
    %717 = vmatprep.subr.bf16.mxu0 %v535
    %718 = vmatpush1.bf16.msra.mxu0 %v534
    %719 = vmatprep.subr.bf16.mxu0 %v538
    %720 = vmatpush1.bf16.msra.mxu0 %v537
    %721 = vmatprep.subr.bf16.mxu0 %v541
    %722 = vmatpush1.bf16.msra.mxu0 %v540
    %723 = vmatprep.subr.bf16.mxu0 %v544
    %724 = vmatpush1.bf16.msra.mxu0 %v543
    %725 = vmatprep.subr.bf16.mxu0 %v547
    %726 = vmatpush1.bf16.msra.mxu0 %v546
    %727 = vmatprep.subr.bf16.mxu0 %v550
    %728 = vmatpush1.bf16.msra.mxu0 %v549
    %729 = vmatprep.subr.bf16.mxu0 %v553
    %730 = vmatpush1.bf16.msra.mxu0 %v552
    %731 = vmatprep.mubr.bf16.mxu0 %v184
    %732 = vmatmul.mubr.bf16.gmra.mrb[0].mxu0 %v183
    %v733 = vpop.f32.mrb[0].mxu0
    %v734 = vadd.f32 0.0, %v733
    %v735 = vpop.f32.mrb[0].mxu0
    %v736 = vadd.f32 0.0, %v735
    %v737 = vpop.f32.mrb[0].mxu0
    %v738 = vpop.f32.mrb[0].mxu0
    %739 = vdwg.mxu0
    %740 = vmatprep.subr.bf16.mxu0 %v556
    %741 = vmatpush1.bf16.msra.mxu0 %v555
    %742 = vmatprep.subr.bf16.mxu0 %v559
    %743 = vmatpush1.bf16.msra.mxu0 %v558
    %744 = vmatprep.subr.bf16.mxu0 %v562
    %745 = vmatpush1.bf16.msra.mxu0 %v561
    %746 = vmatprep.subr.bf16.mxu0 %v565
    %747 = vmatpush1.bf16.msra.mxu0 %v564
    %748 = vmatprep.subr.bf16.mxu0 %v568
    %749 = vmatpush1.bf16.msra.mxu0 %v567
    %750 = vmatprep.subr.bf16.mxu0 %v571
    %751 = vmatpush1.bf16.msra.mxu0 %v570
    %752 = vmatprep.subr.bf16.mxu0 %v574
    %753 = vmatpush1.bf16.msra.mxu0 %v573
    %754 = vmatprep.subr.bf16.mxu0 %v577
    %755 = vmatpush1.bf16.msra.mxu0 %v576
    %756 = vmatprep.subr.bf16.mxu0 %v580
    %757 = vmatpush1.bf16.msra.mxu0 %v579
    %758 = vmatprep.subr.bf16.mxu0 %v583
    %759 = vmatpush1.bf16.msra.mxu0 %v582
    %760 = vmatprep.subr.bf16.mxu0 %v586
    %761 = vmatpush1.bf16.msra.mxu0 %v585
    %762 = vmatprep.subr.bf16.mxu0 %v589
    %763 = vmatpush1.bf16.msra.mxu0 %v588
    %764 = vmatprep.subr.bf16.mxu0 %v592
    %765 = vmatpush1.bf16.msra.mxu0 %v591
    %766 = vmatprep.subr.bf16.mxu0 %v595
    %767 = vmatpush1.bf16.msra.mxu0 %v594
    %768 = vmatprep.subr.bf16.mxu0 %v598
    %769 = vmatpush1.bf16.msra.mxu0 %v597
    %770 = vmatprep.subr.bf16.mxu0 %v601
    %771 = vmatpush1.bf16.msra.mxu0 %v600
    %772 = vmatprep.mubr.bf16.mxu0 %v186
    %773 = vmatmul.mubr.bf16.gmra.mrb[0].mxu0 %v185
    %v774 = vpop.f32.mrb[0].mxu0
    %v775 = vadd.f32 %v734, %v774
    %v776 = vpop.f32.mrb[0].mxu0
    %v777 = vadd.f32 %v736, %v776
    %v778 = vpop.f32.mrb[0].mxu0
    %v779 = vpop.f32.mrb[0].mxu0
    %780 = vdwg.mxu0
    %781 = vmatprep.subr.bf16.mxu0 0
    %782 = vmatpush1.bf16.msra.mxu0 %v509
    %783 = vmatprep.subr.bf16.mxu0 0
    %784 = vmatpush1.bf16.msra.mxu0 %v512
    %785 = vmatprep.subr.bf16.mxu0 0
    %786 = vmatpush1.bf16.msra.mxu0 %v515
    %787 = vmatprep.subr.bf16.mxu0 0
    %788 = vmatpush1.bf16.msra.mxu0 %v518
    %789 = vmatprep.subr.bf16.mxu0 0
    %790 = vmatpush1.bf16.msra.mxu0 %v521
    %791 = vmatprep.subr.bf16.mxu0 0
    %792 = vmatpush1.bf16.msra.mxu0 %v524
    %793 = vmatprep.subr.bf16.mxu0 0
    %794 = vmatpush1.bf16.msra.mxu0 %v527
    %795 = vmatprep.subr.bf16.mxu0 0
    %796 = vmatpush1.bf16.msra.mxu0 %v530
    %797 = vmatprep.subr.bf16.mxu0 0
    %798 = vmatpush1.bf16.msra.mxu0 %v533
    %799 = vmatprep.subr.bf16.mxu0 0
    %800 = vmatpush1.bf16.msra.mxu0 %v536
    %801 = vmatprep.subr.bf16.mxu0 0
    %802 = vmatpush1.bf16.msra.mxu0 %v539
    %803 = vmatprep.subr.bf16.mxu0 0
    %804 = vmatpush1.bf16.msra.mxu0 %v542
    %805 = vmatprep.subr.bf16.mxu0 0
    %806 = vmatpush1.bf16.msra.mxu0 %v545
    %807 = vmatprep.subr.bf16.mxu0 0
    %808 = vmatpush1.bf16.msra.mxu0 %v548
    %809 = vmatprep.subr.bf16.mxu0 0
    %810 = vmatpush1.bf16.msra.mxu0 %v551
    %811 = vmatprep.subr.bf16.mxu0 0
    %812 = vmatpush1.bf16.msra.mxu0 %v554
    %813 = vmatprep.mubr.bf16.mxu0 %v184
    %814 = vmatmul.mubr.bf16.gmra.mrb[0].mxu0 %v183
    %v815 = vpop.f32.mrb[0].mxu0
    %v816 = vadd.f32 0.0, %v815
    %v817 = vpop.f32.mrb[0].mxu0
    %v818 = vpop.f32.mrb[0].mxu0
    %v819 = vpop.f32.mrb[0].mxu0
    %820 = vdwg.mxu0
    %821 = vmatprep.subr.bf16.mxu0 0
    %822 = vmatpush1.bf16.msra.mxu0 %v557
    %823 = vmatprep.subr.bf16.mxu0 0
    %824 = vmatpush1.bf16.msra.mxu0 %v560
    %825 = vmatprep.subr.bf16.mxu0 0
    %826 = vmatpush1.bf16.msra.mxu0 %v563
    %827 = vmatprep.subr.bf16.mxu0 0
    %828 = vmatpush1.bf16.msra.mxu0 %v566
    %829 = vmatprep.subr.bf16.mxu0 0
    %830 = vmatpush1.bf16.msra.mxu0 %v569
    %831 = vmatprep.subr.bf16.mxu0 0
    %832 = vmatpush1.bf16.msra.mxu0 %v572
    %833 = vmatprep.subr.bf16.mxu0 0
    %834 = vmatpush1.bf16.msra.mxu0 %v575
    %835 = vmatprep.subr.bf16.mxu0 0
    %836 = vmatpush1.bf16.msra.mxu0 %v578
    %837 = vmatprep.subr.bf16.mxu0 0
    %838 = vmatpush1.bf16.msra.mxu0 %v581
    %839 = vmatprep.subr.bf16.mxu0 0
    %840 = vmatpush1.bf16.msra.mxu0 %v584
    %841 = vmatprep.subr.bf16.mxu0 0
    %842 = vmatpush1.bf16.msra.mxu0 %v587
    %843 = vmatprep.subr.bf16.mxu0 0
    %844 = vmatpush1.bf16.msra.mxu0 %v590
    %845 = vmatprep.subr.bf16.mxu0 0
    %846 = vmatpush1.bf16.msra.mxu0 %v593
    %847 = vmatprep.subr.bf16.mxu0 0
    %848 = vmatpush1.bf16.msra.mxu0 %v596
    %849 = vmatprep.subr.bf16.mxu0 0
    %850 = vmatpush1.bf16.msra.mxu0 %v599
    %851 = vmatprep.subr.bf16.mxu0 0
    %852 = vmatpush1.bf16.msra.mxu0 %v602
    %853 = vmatprep.mubr.bf16.mxu0 %v186
    %854 = vmatmul.mubr.bf16.gmra.mrb[0].mxu0 %v185
    %v855 = vpop.f32.mrb[0].mxu0
    %v856 = vadd.f32 %v816, %v855
    %v857 = vpop.f32.mrb[0].mxu0
    %v858 = vpop.f32.mrb[0].mxu0
    %v859 = vpop.f32.mrb[0].mxu0
    %860 = vdwg.mxu0
    %v861 = vunpack.c.l.bf16 %v28
    %v862 = vlaneseq
    %v863 = vshrl.u32 %v862, 7
    %v864 = vsub.s32 0, %v863
    %v865 = vrot.slane %v861, %v864
    %v866 = vadd.f32 %v775, %v865
    %v867 = vmax.f32 %v866, 0.0
    %v868 = vld [vmem:[#allocation2 + $0x30c] sm:$0xff]
    %v869 = vld [vmem:[#allocation2 + $0x318] sm:$0xff]
    %v870 = vld [vmem:[#allocation2 + $0x324] sm:$0xff]
    %v871 = vld [vmem:[#allocation2 + $0x330] sm:$0xff]
    %v872 = vld [vmem:[#allocation2 + $0x33c] sm:$0xff]
    %v873 = vld [vmem:[#allocation2 + $0x348] sm:$0xff]
    %v874 = vld [vmem:[#allocation2 + $0x354] sm:$0xff]
    %v875 = vld [vmem:[#allocation2 + $0x360] sm:$0xff]
    %v876 = vld [vmem:[#allocation2 + $0x36c] sm:$0xff]
    %v877 = vld [vmem:[#allocation2 + $0x378] sm:$0xff]
    %v878 = vld [vmem:[#allocation2 + $0x384] sm:$0xff]
    %v879 = vld [vmem:[#allocation2 + $0x390] sm:$0xff]
    %v880 = vld [vmem:[#allocation2 + $0x39c] sm:$0xff]
    %v881 = vld [vmem:[#allocation2 + $0x3a8] sm:$0xff]
    %v882 = vld [vmem:[#allocation2 + $0x3b4] sm:$0xff]
    %v883 = vld [vmem:[#allocation2 + $0x3c0] sm:$0xff]
    %v884 = vpack.c.bf16 %v867, %v867
    %v901 = vunpack.c.l.b16 %v868
    %v902 = vunpack.c.h.b16 %v868
    %v903 = vunpack.c.l.b16 %v869
    %v904 = vunpack.c.h.b16 %v869
    %v905 = vunpack.c.l.b16 %v870
    %v906 = vunpack.c.h.b16 %v870
    %v907 = vunpack.c.l.b16 %v871
    %v908 = vunpack.c.h.b16 %v871
    %v909 = vunpack.c.l.b16 %v872
    %v910 = vunpack.c.h.b16 %v872
    %v911 = vunpack.c.l.b16 %v873
    %v912 = vunpack.c.h.b16 %v873
    %v913 = vunpack.c.l.b16 %v874
    %v914 = vunpack.c.h.b16 %v874
    %v915 = vunpack.c.l.b16 %v875
    %v916 = vunpack.c.h.b16 %v875
    %v917 = vunpack.c.l.b16 %v876
    %v918 = vunpack.c.h.b16 %v876
    %v919 = vunpack.c.l.b16 %v877
    %v920 = vunpack.c.h.b16 %v877
    %v921 = vunpack.c.l.b16 %v878
    %v922 = vunpack.c.h.b16 %v878
    %v923 = vunpack.c.l.b16 %v879
    %v924 = vunpack.c.h.b16 %v879
    %v925 = vunpack.c.l.b16 %v880
    %v926 = vunpack.c.h.b16 %v880
    %v927 = vunpack.c.l.b16 %v881
    %v928 = vunpack.c.h.b16 %v881
    %v929 = vunpack.c.l.b16 %v882
    %v930 = vunpack.c.h.b16 %v882
    %v931 = vunpack.c.l.b16 %v883
    %v932 = vunpack.c.h.b16 %v883
    %v933 = vpack.c.b16 %v903, %v901
    %v934 = vpack.c.b16 %v904, %v902
    %v935 = vpack.c.b16 %v907, %v905
    %v936 = vpack.c.b16 %v908, %v906
    %v937 = vpack.c.b16 %v911, %v909
    %v938 = vpack.c.b16 %v912, %v910
    %v939 = vpack.c.b16 %v915, %v913
    %v940 = vpack.c.b16 %v916, %v914
    %v941 = vpack.c.b16 %v919, %v917
    %v942 = vpack.c.b16 %v920, %v918
    %v943 = vpack.c.b16 %v923, %v921
    %v944 = vpack.c.b16 %v924, %v922
    %v945 = vpack.c.b16 %v927, %v925
    %v946 = vpack.c.b16 %v928, %v926
    %v947 = vpack.c.b16 %v931, %v929
    %v948 = vpack.c.b16 %v932, %v930
    %965 = vmatprep.subr.bf16.mxu0 %v934
    %966 = vmatpush1.bf16.msra.mxu0 %v933
    %967 = vmatprep.subr.bf16.mxu0 %v936
    %968 = vmatpush1.bf16.msra.mxu0 %v935
    %969 = vmatprep.subr.bf16.mxu0 %v938
    %970 = vmatpush1.bf16.msra.mxu0 %v937
    %971 = vmatprep.subr.bf16.mxu0 %v940
    %972 = vmatpush1.bf16.msra.mxu0 %v939
    %973 = vmatprep.subr.bf16.mxu0 %v942
    %974 = vmatpush1.bf16.msra.mxu0 %v941
    %975 = vmatprep.subr.bf16.mxu0 %v944
    %976 = vmatpush1.bf16.msra.mxu0 %v943
    %977 = vmatprep.subr.bf16.mxu0 %v946
    %978 = vmatpush1.bf16.msra.mxu0 %v945
    %979 = vmatprep.subr.bf16.mxu0 %v948
    %980 = vmatpush1.bf16.msra.mxu0 %v947
    %981 = vmatprep.subr.bf16.mxu0 0
    %982 = vmatpush1.bf16.msra.mxu0 0
    %983 = vmatprep.subr.bf16.mxu0 0
    %984 = vmatpush1.bf16.msra.mxu0 0
    %985 = vmatprep.subr.bf16.mxu0 0
    %986 = vmatpush1.bf16.msra.mxu0 0
    %987 = vmatprep.subr.bf16.mxu0 0
    %988 = vmatpush1.bf16.msra.mxu0 0
    %989 = vmatprep.subr.bf16.mxu0 0
    %990 = vmatpush1.bf16.msra.mxu0 0
    %991 = vmatprep.subr.bf16.mxu0 0
    %992 = vmatpush1.bf16.msra.mxu0 0
    %993 = vmatprep.subr.bf16.mxu0 0
    %994 = vmatpush1.bf16.msra.mxu0 0
    %995 = vmatprep.subr.bf16.mxu0 0
    %996 = vmatpush1.bf16.msra.mxu0 0
    %997 = vmatprep.mubr.bf16.mxu0 0
    %998 = vmatmul.mubr.bf16.gmra.mrb[0].mxu0 %v884
    %v999 = vpop.f32.mrb[0].mxu0
    %v1000 = vadd.f32 0.0, %v999
    %v1001 = vpop.f32.mrb[0].mxu0
    %v1002 = vadd.f32 0.0, %v1001
    %v1003 = vpop.f32.mrb[0].mxu0
    %v1004 = vpop.f32.mrb[0].mxu0
    %1005 = vdwg.mxu0
    %v1006 = vadd.f32 %v777, %v1000
    %v1007 = vadd.f32 %v856, %v1002
    %v1008 = vunpack.c.l.bf16 %v29
    %v1009 = vunpack.c.h.bf16 %v29
    %v1010 = vlaneseq
    %v1011 = vshrl.u32 %v1010, 7
    %v1012 = vsub.s32 1, %v1011
    %v1013 = vrot.slane %v1008, %v1012
    %v1014 = vlaneseq
    %v1015 = vshrl.u32 %v1014, 7
    %v1016 = vsub.s32 1, %v1015
    %v1017 = vrot.slane %v1009, %v1016
    %v1018 = vadd.f32 %v1006, %v1013
    %v1019 = vadd.f32 %v1007, %v1017
    %v1020 = vmax.f32 %v1018, 0.0
    %v1021 = vmax.f32 %v1019, 0.0
    %v1022 = vld [vmem:[#allocation2 + $0x3cc] sm:$0xf]
    %v1023 = vld [vmem:[#allocation2 + $0x3d8] sm:$0xf]
    %v1024 = vld [vmem:[#allocation2 + $0x3e4] sm:$0xf]
    %v1025 = vld [vmem:[#allocation2 + $0x3f0] sm:$0xf]
    %v1026 = vld [vmem:[#allocation2 + $0x3fc] sm:$0xf]
    %v1027 = vld [vmem:[#allocation2 + $0x408] sm:$0xf]
    %v1028 = vld [vmem:[#allocation2 + $0x414] sm:$0xf]
    %v1029 = vld [vmem:[#allocation2 + $0x420] sm:$0xf]
    %v1030 = vld [vmem:[#allocation2 + $0x42c] sm:$0xf]
    %v1031 = vld [vmem:[#allocation2 + $0x438] sm:$0xf]
    %v1032 = vld [vmem:[#allocation2 + $0x444] sm:$0xf]
    %v1033 = vld [vmem:[#allocation2 + $0x450] sm:$0xf]
    %v1034 = vld [vmem:[#allocation2 + $0x45c] sm:$0xf]
    %v1035 = vld [vmem:[#allocation2 + $0x468] sm:$0xf]
    %v1036 = vld [vmem:[#allocation2 + $0x474] sm:$0xf]
    %v1037 = vld [vmem:[#allocation2 + $0x480] sm:$0xf]
    %v1038 = vld [vmem:[#allocation2 + $0x48c] sm:$0xf]
    %v1039 = vld [vmem:[#allocation2 + $0x498] sm:$0xf]
    %v1040 = vld [vmem:[#allocation2 + $0x4a4] sm:$0xf]
    %v1041 = vld [vmem:[#allocation2 + $0x4b0] sm:$0xf]
    %v1042 = vld [vmem:[#allocation2 + $0x4bc] sm:$0xf]
    %v1043 = vld [vmem:[#allocation2 + $0x4c8] sm:$0xf]
    %v1044 = vld [vmem:[#allocation2 + $0x4d4] sm:$0xf]
    %v1045 = vld [vmem:[#allocation2 + $0x4e0] sm:$0xf]
    %v1046 = vld [vmem:[#allocation2 + $0x4ec] sm:$0xf]
    %v1047 = vld [vmem:[#allocation2 + $0x4f8] sm:$0xf]
    %v1048 = vld [vmem:[#allocation2 + $0x504] sm:$0xf]
    %v1049 = vld [vmem:[#allocation2 + $0x510] sm:$0xf]
    %v1050 = vld [vmem:[#allocation2 + $0x51c] sm:$0xf]
    %v1051 = vld [vmem:[#allocation2 + $0x528] sm:$0xf]
    %v1052 = vld [vmem:[#allocation2 + $0x534] sm:$0xf]
    %v1053 = vld [vmem:[#allocation2 + $0x540] sm:$0xf]
    %v1054 = vpack.c.bf16 %v1020, %v1020
    %v1055 = vpack.c.bf16 %v1021, %v1021
    %v1056 = vld [vmem:[#allocation2 + $0x54c] sm:$0xff]
    %v1057 = vld [vmem:[#allocation2 + $0x554] sm:$0xf]
    %v1058 = vld [vmem:[#allocation2 + $0x558] sm:$0xff]
    %v1059 = vld [vmem:[#allocation2 + $0x560] sm:$0xf]
    %v1060 = vld [vmem:[#allocation2 + $0x564] sm:$0xff]
    %v1061 = vld [vmem:[#allocation2 + $0x56c] sm:$0xf]
    %v1062 = vld [vmem:[#allocation2 + $0x570] sm:$0xff]
    %v1063 = vld [vmem:[#allocation2 + $0x578] sm:$0xf]
    %v1064 = vld [vmem:[#allocation2 + $0x57c] sm:$0xff]
    %v1065 = vld [vmem:[#allocation2 + $0x584] sm:$0xf]
    %v1066 = vld [vmem:[#allocation2 + $0x588] sm:$0xff]
    %v1067 = vld [vmem:[#allocation2 + $0x590] sm:$0xf]
    %v1068 = vld [vmem:[#allocation2 + $0x594] sm:$0xff]
    %v1069 = vld [vmem:[#allocation2 + $0x59c] sm:$0xf]
    %v1070 = vld [vmem:[#allocation2 + $0x5a0] sm:$0xff]
    %v1071 = vld [vmem:[#allocation2 + $0x5a8] sm:$0xf]
    %v1072 = vld [vmem:[#allocation2 + $0x5ac] sm:$0xff]
    %v1073 = vld [vmem:[#allocation2 + $0x5b4] sm:$0xf]
    %v1074 = vld [vmem:[#allocation2 + $0x5b8] sm:$0xff]
    %v1075 = vld [vmem:[#allocation2 + $0x5c0] sm:$0xf]
    %v1076 = vld [vmem:[#allocation2 + $0x5c4] sm:$0xff]
    %v1077 = vld [vmem:[#allocation2 + $0x5cc] sm:$0xf]
    %v1078 = vld [vmem:[#allocation2 + $0x5d0] sm:$0xff]
    %v1079 = vld [vmem:[#allocation2 + $0x5d8] sm:$0xf]
    %v1080 = vld [vmem:[#allocation2 + $0x5dc] sm:$0xff]
    %v1081 = vld [vmem:[#allocation2 + $0x5e4] sm:$0xf]
    %v1082 = vld [vmem:[#allocation2 + $0x5e8] sm:$0xff]
    %v1083 = vld [vmem:[#allocation2 + $0x5f0] sm:$0xf]
    %v1084 = vld [vmem:[#allocation2 + $0x5f4] sm:$0xff]
    %v1085 = vld [vmem:[#allocation2 + $0x5fc] sm:$0xf]
    %v1086 = vld [vmem:[#allocation2 + $0x600] sm:$0xff]
    %v1087 = vld [vmem:[#allocation2 + $0x608] sm:$0xf]
    %v1088 = vld [vmem:[#allocation2 + $0x60c] sm:$0xff]
    %v1089 = vld [vmem:[#allocation2 + $0x614] sm:$0xf]
    %v1090 = vld [vmem:[#allocation2 + $0x618] sm:$0xff]
    %v1091 = vld [vmem:[#allocation2 + $0x620] sm:$0xf]
    %v1092 = vld [vmem:[#allocation2 + $0x624] sm:$0xff]
    %v1093 = vld [vmem:[#allocation2 + $0x62c] sm:$0xf]
    %v1094 = vld [vmem:[#allocation2 + $0x630] sm:$0xff]
    %v1095 = vld [vmem:[#allocation2 + $0x638] sm:$0xf]
    %v1098 = vunpack.c.l.s4 1983009808
    %v1099 = vunpack.c.0.s8 %v1098
    %v1100 = vlaneseq
    %v1101 = vshrl.u32 %v1100, 7
    %v1102 = vsub.s32 %v1099, %v1101
    %v1103 = vrot.slane %v27, %v1102
    %v1104 = vcombine.high %v1103, %v1103
    %v1107 = vpack.c.bf16 %v1103, %v1103
    %v1108 = vpack.c.bf16 %v1104, %v1104
    %v1149 = vunpack.c.l.b16 %v1056
    %v1150 = vunpack.c.h.b16 %v1056
    %v1151 = vunpack.c.l.b16 %v1057
    %v1152 = vunpack.c.l.b16 %v1058
    %v1153 = vunpack.c.h.b16 %v1058
    %v1154 = vunpack.c.l.b16 %v1059
    %v1155 = vunpack.c.l.b16 %v1060
    %v1156 = vunpack.c.h.b16 %v1060
    %v1157 = vunpack.c.l.b16 %v1061
    %v1158 = vunpack.c.l.b16 %v1062
    %v1159 = vunpack.c.h.b16 %v1062
    %v1160 = vunpack.c.l.b16 %v1063
    %v1161 = vunpack.c.l.b16 %v1064
    %v1162 = vunpack.c.h.b16 %v1064
    %v1163 = vunpack.c.l.b16 %v1065
    %v1164 = vunpack.c.l.b16 %v1066
    %v1165 = vunpack.c.h.b16 %v1066
    %v1166 = vunpack.c.l.b16 %v1067
    %v1167 = vunpack.c.l.b16 %v1068
    %v1168 = vunpack.c.h.b16 %v1068
    %v1169 = vunpack.c.l.b16 %v1069
    %v1170 = vunpack.c.l.b16 %v1070
    %v1171 = vunpack.c.h.b16 %v1070
    %v1172 = vunpack.c.l.b16 %v1071
    %v1173 = vunpack.c.l.b16 %v1072
    %v1174 = vunpack.c.h.b16 %v1072
    %v1175 = vunpack.c.l.b16 %v1073
    %v1176 = vunpack.c.l.b16 %v1074
    %v1177 = vunpack.c.h.b16 %v1074
    %v1178 = vunpack.c.l.b16 %v1075
    %v1179 = vunpack.c.l.b16 %v1076
    %v1180 = vunpack.c.h.b16 %v1076
    %v1181 = vunpack.c.l.b16 %v1077
    %v1182 = vunpack.c.l.b16 %v1078
    %v1183 = vunpack.c.h.b16 %v1078
    %v1184 = vunpack.c.l.b16 %v1079
    %v1185 = vunpack.c.l.b16 %v1080
    %v1186 = vunpack.c.h.b16 %v1080
    %v1187 = vunpack.c.l.b16 %v1081
    %v1188 = vunpack.c.l.b16 %v1082
    %v1189 = vunpack.c.h.b16 %v1082
    %v1190 = vunpack.c.l.b16 %v1083
    %v1191 = vunpack.c.l.b16 %v1084
    %v1192 = vunpack.c.h.b16 %v1084
    %v1193 = vunpack.c.l.b16 %v1085
    %v1194 = vunpack.c.l.b16 %v1086
    %v1195 = vunpack.c.h.b16 %v1086
    %v1196 = vunpack.c.l.b16 %v1087
    %v1197 = vunpack.c.l.b16 %v1088
    %v1198 = vunpack.c.h.b16 %v1088
    %v1199 = vunpack.c.l.b16 %v1089
    %v1200 = vunpack.c.l.b16 %v1090
    %v1201 = vunpack.c.h.b16 %v1090
    %v1202 = vunpack.c.l.b16 %v1091
    %v1203 = vunpack.c.l.b16 %v1092
    %v1204 = vunpack.c.h.b16 %v1092
    %v1205 = vunpack.c.l.b16 %v1093
    %v1206 = vunpack.c.l.b16 %v1094
    %v1207 = vunpack.c.h.b16 %v1094
    %v1208 = vunpack.c.l.b16 %v1095
    %v1209 = vpack.c.b16 %v1152, %v1149
    %v1210 = vpack.c.b16 %v1153, %v1150
    %v1211 = vpack.c.b16 %v1154, %v1151
    %v1212 = vpack.c.b16 %v1158, %v1155
    %v1213 = vpack.c.b16 %v1159, %v1156
    %v1214 = vpack.c.b16 %v1160, %v1157
    %v1215 = vpack.c.b16 %v1164, %v1161
    %v1216 = vpack.c.b16 %v1165, %v1162
    %v1217 = vpack.c.b16 %v1166, %v1163
    %v1218 = vpack.c.b16 %v1170, %v1167
    %v1219 = vpack.c.b16 %v1171, %v1168
    %v1220 = vpack.c.b16 %v1172, %v1169
    %v1221 = vpack.c.b16 %v1176, %v1173
    %v1222 = vpack.c.b16 %v1177, %v1174
    %v1223 = vpack.c.b16 %v1178, %v1175
    %v1224 = vpack.c.b16 %v1182, %v1179
    %v1225 = vpack.c.b16 %v1183, %v1180
    %v1226 = vpack.c.b16 %v1184, %v1181
    %v1227 = vpack.c.b16 %v1188, %v1185
    %v1228 = vpack.c.b16 %v1189, %v1186
    %v1229 = vpack.c.b16 %v1190, %v1187
    %v1230 = vpack.c.b16 %v1194, %v1191
    %v1231 = vpack.c.b16 %v1195, %v1192
    %v1232 = vpack.c.b16 %v1196, %v1193
    %v1233 = vpack.c.b16 %v1200, %v1197
    %v1234 = vpack.c.b16 %v1201, %v1198
    %v1235 = vpack.c.b16 %v1202, %v1199
    %v1236 = vpack.c.b16 %v1206, %v1203
    %v1237 = vpack.c.b16 %v1207, %v1204
    %v1238 = vpack.c.b16 %v1208, %v1205
    %vm1269 = vcmask 261120
    %v1271 = vsel %vm1269, %v1108, 0
    %1273 = vmatprep.subr.bf16.mxu0 %v1210
    %1274 = vmatpush1.bf16.msra.mxu0 %v1209
    %1275 = vmatprep.subr.bf16.mxu0 %v1213
    %1276 = vmatpush1.bf16.msra.mxu0 %v1212
    %1277 = vmatprep.subr.bf16.mxu0 %v1216
    %1278 = vmatpush1.bf16.msra.mxu0 %v1215
    %1279 = vmatprep.subr.bf16.mxu0 %v1219
    %1280 = vmatpush1.bf16.msra.mxu0 %v1218
    %1281 = vmatprep.subr.bf16.mxu0 %v1222
    %1282 = vmatpush1.bf16.msra.mxu0 %v1221
    %1283 = vmatprep.subr.bf16.mxu0 %v1225
    %1284 = vmatpush1.bf16.msra.mxu0 %v1224
    %1285 = vmatprep.subr.bf16.mxu0 %v1228
    %1286 = vmatpush1.bf16.msra.mxu0 %v1227
    %1287 = vmatprep.subr.bf16.mxu0 %v1231
    %1288 = vmatpush1.bf16.msra.mxu0 %v1230
    %1289 = vmatprep.subr.bf16.mxu0 %v1234
    %1290 = vmatpush1.bf16.msra.mxu0 %v1233
    %1291 = vmatprep.subr.bf16.mxu0 %v1237
    %1292 = vmatpush1.bf16.msra.mxu0 %v1236
    %1293 = vmatprep.subr.bf16.mxu0 0
    %1294 = vmatpush1.bf16.msra.mxu0 0
    %1295 = vmatprep.subr.bf16.mxu0 0
    %1296 = vmatpush1.bf16.msra.mxu0 0
    %1297 = vmatprep.subr.bf16.mxu0 0
    %1298 = vmatpush1.bf16.msra.mxu0 0
    %1299 = vmatprep.subr.bf16.mxu0 0
    %1300 = vmatpush1.bf16.msra.mxu0 0
    %1301 = vmatprep.subr.bf16.mxu0 0
    %1302 = vmatpush1.bf16.msra.mxu0 0
    %1303 = vmatprep.subr.bf16.mxu0 0
    %1304 = vmatpush1.bf16.msra.mxu0 0
    %1305 = vmatprep.mubr.bf16.mxu0 %v1271
    %1306 = vmatmul.mubr.bf16.gmra.mrb[0].mxu0 %v1107
    %v1307 = vpop.f32.mrb[0].mxu0
    %v1308 = vadd.f32 0.0, %v1307
    %v1309 = vpop.f32.mrb[0].mxu0
    %v1310 = vadd.f32 0.0, %v1309
    %v1311 = vpop.f32.mrb[0].mxu0
    %v1312 = vpop.f32.mrb[0].mxu0
    %1313 = vdwg.mxu0
    %1314 = vmatprep.subr.bf16.mxu0 0
    %1315 = vmatpush1.bf16.msra.mxu0 %v1211
    %1316 = vmatprep.subr.bf16.mxu0 0
    %1317 = vmatpush1.bf16.msra.mxu0 %v1214
    %1318 = vmatprep.subr.bf16.mxu0 0
    %1319 = vmatpush1.bf16.msra.mxu0 %v1217
    %1320 = vmatprep.subr.bf16.mxu0 0
    %1321 = vmatpush1.bf16.msra.mxu0 %v1220
    %1322 = vmatprep.subr.bf16.mxu0 0
    %1323 = vmatpush1.bf16.msra.mxu0 %v1223
    %1324 = vmatprep.subr.bf16.mxu0 0
    %1325 = vmatpush1.bf16.msra.mxu0 %v1226
    %1326 = vmatprep.subr.bf16.mxu0 0
    %1327 = vmatpush1.bf16.msra.mxu0 %v1229
    %1328 = vmatprep.subr.bf16.mxu0 0
    %1329 = vmatpush1.bf16.msra.mxu0 %v1232
    %1330 = vmatprep.subr.bf16.mxu0 0
    %1331 = vmatpush1.bf16.msra.mxu0 %v1235
    %1332 = vmatprep.subr.bf16.mxu0 0
    %1333 = vmatpush1.bf16.msra.mxu0 %v1238
    %1334 = vmatprep.subr.bf16.mxu0 0
    %1335 = vmatpush1.bf16.msra.mxu0 0
    %1336 = vmatprep.subr.bf16.mxu0 0
    %1337 = vmatpush1.bf16.msra.mxu0 0
    %1338 = vmatprep.subr.bf16.mxu0 0
    %1339 = vmatpush1.bf16.msra.mxu0 0
    %1340 = vmatprep.subr.bf16.mxu0 0
    %1341 = vmatpush1.bf16.msra.mxu0 0
    %1342 = vmatprep.subr.bf16.mxu0 0
    %1343 = vmatpush1.bf16.msra.mxu0 0
    %1344 = vmatprep.subr.bf16.mxu0 0
    %1345 = vmatpush1.bf16.msra.mxu0 0
    %1346 = vmatprep.mubr.bf16.mxu0 %v1271
    %1347 = vmatmul.mubr.bf16.gmra.mrb[0].mxu0 %v1107
    %v1348 = vpop.f32.mrb[0].mxu0
    %v1349 = vadd.f32 0.0, %v1348
    %v1350 = vpop.f32.mrb[0].mxu0
    %v1351 = vpop.f32.mrb[0].mxu0
    %v1352 = vpop.f32.mrb[0].mxu0
    %1353 = vdwg.mxu0
    %v1354 = vunpack.c.l.bf16 %v30
    %v1355 = vlaneseq
    %v1356 = vshrl.u32 %v1355, 7
    %v1357 = vsub.s32 2, %v1356
    %v1358 = vrot.slane %v1354, %v1357
    %v1359 = vadd.f32 %v1308, %v1358
    %v1360 = vmax.f32 %v1359, 0.0
    %v1362 = vrot.slane %v30, 4
    %v1364 = vunpack.c.l.bf16 %v1362
    %v1365 = vlaneseq
    %v1366 = vshrl.u32 %v1365, 7
    %v1367 = vsub.s32 2, %v1366
    %v1368 = vrot.slane %v1364, %v1367
    %v1369 = vadd.f32 %v1310, %v1368
    %v1370 = vld [vmem:[#allocation2 + $0x63c] sm:$0xf]
    %v1371 = vld [vmem:[#allocation2 + $0x648] sm:$0xf]
    %v1372 = vld [vmem:[#allocation2 + $0x654] sm:$0xf]
    %v1373 = vld [vmem:[#allocation2 + $0x660] sm:$0xf]
    %v1374 = vld [vmem:[#allocation2 + $0x66c] sm:$0xf]
    %v1375 = vld [vmem:[#allocation2 + $0x678] sm:$0xf]
    %v1376 = vld [vmem:[#allocation2 + $0x684] sm:$0xf]
    %v1377 = vld [vmem:[#allocation2 + $0x690] sm:$0xf]
    %v1378 = vld [vmem:[#allocation2 + $0x69c] sm:$0xf]
    %v1379 = vld [vmem:[#allocation2 + $0x6a8] sm:$0xf]
    %v1380 = vld [vmem:[#allocation2 + $0x6b4] sm:$0xf]
    %v1381 = vld [vmem:[#allocation2 + $0x6c0] sm:$0xf]
    %v1382 = vld [vmem:[#allocation2 + $0x6cc] sm:$0xf]
    %v1383 = vld [vmem:[#allocation2 + $0x6d8] sm:$0xf]
    %v1384 = vld [vmem:[#allocation2 + $0x6e4] sm:$0xf]
    %v1385 = vld [vmem:[#allocation2 + $0x6f0] sm:$0xf]
    %v1386 = vpack.c.bf16 %v1360, %v1360
    %v1387 = vunpack.c.l.bf16 %v31
    %v1388 = vlaneseq
    %v1389 = vshrl.u32 %v1388, 7
    %v1390 = vsub.s32 3, %v1389
    %v1391 = vrot.slane %v1387, %v1390
    %v1408 = vunpack.c.l.b16 %v1370
    %v1409 = vunpack.c.l.b16 %v1371
    %v1410 = vunpack.c.l.b16 %v1372
    %v1411 = vunpack.c.l.b16 %v1373
    %v1412 = vunpack.c.l.b16 %v1374
    %v1413 = vunpack.c.l.b16 %v1375
    %v1414 = vunpack.c.l.b16 %v1376
    %v1415 = vunpack.c.l.b16 %v1377
    %v1416 = vunpack.c.l.b16 %v1378
    %v1417 = vunpack.c.l.b16 %v1379
    %v1418 = vunpack.c.l.b16 %v1380
    %v1419 = vunpack.c.l.b16 %v1381
    %v1420 = vunpack.c.l.b16 %v1382
    %v1421 = vunpack.c.l.b16 %v1383
    %v1422 = vunpack.c.l.b16 %v1384
    %v1423 = vunpack.c.l.b16 %v1385
    %v1424 = vpack.c.b16 %v1409, %v1408
    %v1425 = vpack.c.b16 %v1411, %v1410
    %v1426 = vpack.c.b16 %v1413, %v1412
    %v1427 = vpack.c.b16 %v1415, %v1414
    %v1428 = vpack.c.b16 %v1417, %v1416
    %v1429 = vpack.c.b16 %v1419, %v1418
    %v1430 = vpack.c.b16 %v1421, %v1420
    %v1431 = vpack.c.b16 %v1423, %v1422
    %1440 = vmatprep.subr.bf16.mxu0 0
    %1441 = vmatpush1.bf16.msra.mxu0 %v1424
    %1442 = vmatprep.subr.bf16.mxu0 0
    %1443 = vmatpush1.bf16.msra.mxu0 %v1425
    %1444 = vmatprep.subr.bf16.mxu0 0
    %1445 = vmatpush1.bf16.msra.mxu0 %v1426
    %1446 = vmatprep.subr.bf16.mxu0 0
    %1447 = vmatpush1.bf16.msra.mxu0 %v1427
    %1448 = vmatprep.subr.bf16.mxu0 0
    %1449 = vmatpush1.bf16.msra.mxu0 %v1428
    %1450 = vmatprep.subr.bf16.mxu0 0
    %1451 = vmatpush1.bf16.msra.mxu0 %v1429
    %1452 = vmatprep.subr.bf16.mxu0 0
    %1453 = vmatpush1.bf16.msra.mxu0 %v1430
    %1454 = vmatprep.subr.bf16.mxu0 0
    %1455 = vmatpush1.bf16.msra.mxu0 %v1431
    %1456 = vmatprep.subr.bf16.mxu0 0
    %1457 = vmatpush1.bf16.msra.mxu0 0
    %1458 = vmatprep.subr.bf16.mxu0 0
    %1459 = vmatpush1.bf16.msra.mxu0 0
    %1460 = vmatprep.subr.bf16.mxu0 0
    %1461 = vmatpush1.bf16.msra.mxu0 0
    %1462 = vmatprep.subr.bf16.mxu0 0
    %1463 = vmatpush1.bf16.msra.mxu0 0
    %1464 = vmatprep.subr.bf16.mxu0 0
    %1465 = vmatpush1.bf16.msra.mxu0 0
    %1466 = vmatprep.subr.bf16.mxu0 0
    %1467 = vmatpush1.bf16.msra.mxu0 0
    %1468 = vmatprep.subr.bf16.mxu0 0
    %1469 = vmatpush1.bf16.msra.mxu0 0
    %1470 = vmatprep.subr.bf16.mxu0 0
    %1471 = vmatpush1.bf16.msra.mxu0 0
    %1472 = vmatprep.mubr.bf16.mxu0 0
    %1473 = vmatmul.mubr.bf16.gmra.mrb[0].mxu0 %v1386
    %v1474 = vpop.f32.mrb[0].mxu0
    %v1475 = vadd.f32 %v1391, %v1474
    %v1476 = vpop.f32.mrb[0].mxu0
    %v1477 = vpop.f32.mrb[0].mxu0
    %v1478 = vpop.f32.mrb[0].mxu0
    %1479 = vdwg.mxu0
    %v1480 = vmax.f32 %v1475, 0.0
    %v1481 = vxor.u32 %v1475, 2147483648
    %v1482 = vmul.f32 %v1481, 1.442695
    %v1483 = vpow.pop %v1482
    %v1484 = vadd.f32 %v1483, 1.0
    %v1485 = vrcp.pop %v1484
    %v1486 = vmul.f32 1.0, %v1485
    %v1487 = vld [vmem:[#allocation2 + $0x6fc] sm:$0xf]
    %v1488 = vld [vmem:[#allocation2 + $0x708] sm:$0xf]
    %v1489 = vld [vmem:[#allocation2 + $0x714] sm:$0xf]
    %v1490 = vld [vmem:[#allocation2 + $0x720] sm:$0xf]
    %v1491 = vpack.c.bf16 %v1480, %v1480
    %v1496 = vunpack.c.l.b16 %v1487
    %v1497 = vunpack.c.l.b16 %v1488
    %v1498 = vunpack.c.l.b16 %v1489
    %v1499 = vunpack.c.l.b16 %v1490
    %v1500 = vpack.c.b16 %v1497, %v1496
    %v1501 = vpack.c.b16 %v1499, %v1498
    %v1505 = vsel %vm1269, %v1491, 0
    %1507 = vmatprep.subr.bf16.mxu0 0
    %1508 = vmatpush1.bf16.msra.mxu0 %v1500
    %1509 = vmatprep.subr.bf16.mxu0 0
    %1510 = vmatpush1.bf16.msra.mxu0 %v1501
    %1511 = vmatprep.subr.bf16.mxu0 0
    %1512 = vmatpush1.bf16.msra.mxu0 0
    %1513 = vmatprep.subr.bf16.mxu0 0
    %1514 = vmatpush1.bf16.msra.mxu0 0
    %1515 = vmatprep.subr.bf16.mxu0 0
    %1516 = vmatpush1.bf16.msra.mxu0 0
    %1517 = vmatprep.subr.bf16.mxu0 0
    %1518 = vmatpush1.bf16.msra.mxu0 0
    %1519 = vmatprep.subr.bf16.mxu0 0
    %1520 = vmatpush1.bf16.msra.mxu0 0
    %1521 = vmatprep.subr.bf16.mxu0 0
    %1522 = vmatpush1.bf16.msra.mxu0 0
    %1523 = vmatprep.subr.bf16.mxu0 0
    %1524 = vmatpush1.bf16.msra.mxu0 0
    %1525 = vmatprep.subr.bf16.mxu0 0
    %1526 = vmatpush1.bf16.msra.mxu0 0
    %1527 = vmatprep.subr.bf16.mxu0 0
    %1528 = vmatpush1.bf16.msra.mxu0 0
    %1529 = vmatprep.subr.bf16.mxu0 0
    %1530 = vmatpush1.bf16.msra.mxu0 0
    %1531 = vmatprep.subr.bf16.mxu0 0
    %1532 = vmatpush1.bf16.msra.mxu0 0
    %1533 = vmatprep.subr.bf16.mxu0 0
    %1534 = vmatpush1.bf16.msra.mxu0 0
    %1535 = vmatprep.subr.bf16.mxu0 0
    %1536 = vmatpush1.bf16.msra.mxu0 0
    %1537 = vmatprep.subr.bf16.mxu0 0
    %1538 = vmatpush1.bf16.msra.mxu0 0
    %1539 = vmatprep.mubr.bf16.mxu0 0
    %1540 = vmatmul.mubr.bf16.gmra.mrb[0].mxu0 %v1505
    %v1541 = vpop.f32.mrb[0].mxu0
    %v1542 = vadd.f32 0.0, %v1541
    %v1543 = vpop.f32.mrb[0].mxu0
    %v1544 = vpop.f32.mrb[0].mxu0
    %v1545 = vpop.f32.mrb[0].mxu0
    %1546 = vdwg.mxu0
    %v1579 = vunpack.c.l.b16 %v1022
    %v1580 = vunpack.c.l.b16 %v1023
    %v1581 = vunpack.c.l.b16 %v1024
    %v1582 = vunpack.c.l.b16 %v1025
    %v1583 = vunpack.c.l.b16 %v1026
    %v1584 = vunpack.c.l.b16 %v1027
    %v1585 = vunpack.c.l.b16 %v1028
    %v1586 = vunpack.c.l.b16 %v1029
    %v1587 = vunpack.c.l.b16 %v1030
    %v1588 = vunpack.c.l.b16 %v1031
    %v1589 = vunpack.c.l.b16 %v1032
    %v1590 = vunpack.c.l.b16 %v1033
    %v1591 = vunpack.c.l.b16 %v1034
    %v1592 = vunpack.c.l.b16 %v1035
    %v1593 = vunpack.c.l.b16 %v1036
    %v1594 = vunpack.c.l.b16 %v1037
    %v1595 = vunpack.c.l.b16 %v1038
    %v1596 = vunpack.c.l.b16 %v1039
    %v1597 = vunpack.c.l.b16 %v1040
    %v1598 = vunpack.c.l.b16 %v1041
    %v1599 = vunpack.c.l.b16 %v1042
    %v1600 = vunpack.c.l.b16 %v1043
    %v1601 = vunpack.c.l.b16 %v1044
    %v1602 = vunpack.c.l.b16 %v1045
    %v1603 = vunpack.c.l.b16 %v1046
    %v1604 = vunpack.c.l.b16 %v1047
    %v1605 = vunpack.c.l.b16 %v1048
    %v1606 = vunpack.c.l.b16 %v1049
    %v1607 = vunpack.c.l.b16 %v1050
    %v1608 = vunpack.c.l.b16 %v1051
    %v1609 = vunpack.c.l.b16 %v1052
    %v1610 = vunpack.c.l.b16 %v1053
    %v1611 = vpack.c.b16 %v1580, %v1579
    %v1612 = vpack.c.b16 %v1582, %v1581
    %v1613 = vpack.c.b16 %v1584, %v1583
    %v1614 = vpack.c.b16 %v1586, %v1585
    %v1615 = vpack.c.b16 %v1588, %v1587
    %v1616 = vpack.c.b16 %v1590, %v1589
    %v1617 = vpack.c.b16 %v1592, %v1591
    %v1618 = vpack.c.b16 %v1594, %v1593
    %v1619 = vpack.c.b16 %v1596, %v1595
    %v1620 = vpack.c.b16 %v1598, %v1597
    %v1621 = vpack.c.b16 %v1600, %v1599
    %v1622 = vpack.c.b16 %v1602, %v1601
    %v1623 = vpack.c.b16 %v1604, %v1603
    %v1624 = vpack.c.b16 %v1606, %v1605
    %v1625 = vpack.c.b16 %v1608, %v1607
    %v1626 = vpack.c.b16 %v1610, %v1609
    %1643 = vmatprep.subr.bf16.mxu0 0
    %1644 = vmatpush1.bf16.msra.mxu0 %v1611
    %1645 = vmatprep.subr.bf16.mxu0 0
    %1646 = vmatpush1.bf16.msra.mxu0 %v1612
    %1647 = vmatprep.subr.bf16.mxu0 0
    %1648 = vmatpush1.bf16.msra.mxu0 %v1613
    %1649 = vmatprep.subr.bf16.mxu0 0
    %1650 = vmatpush1.bf16.msra.mxu0 %v1614
    %1651 = vmatprep.subr.bf16.mxu0 0
    %1652 = vmatpush1.bf16.msra.mxu0 %v1615
    %1653 = vmatprep.subr.bf16.mxu0 0
    %1654 = vmatpush1.bf16.msra.mxu0 %v1616
    %1655 = vmatprep.subr.bf16.mxu0 0
    %1656 = vmatpush1.bf16.msra.mxu0 %v1617
    %1657 = vmatprep.subr.bf16.mxu0 0
    %1658 = vmatpush1.bf16.msra.mxu0 %v1618
    %1659 = vmatprep.subr.bf16.mxu0 0
    %1660 = vmatpush1.bf16.msra.mxu0 %v1619
    %1661 = vmatprep.subr.bf16.mxu0 0
    %1662 = vmatpush1.bf16.msra.mxu0 %v1620
    %1663 = vmatprep.subr.bf16.mxu0 0
    %1664 = vmatpush1.bf16.msra.mxu0 %v1621
    %1665 = vmatprep.subr.bf16.mxu0 0
    %1666 = vmatpush1.bf16.msra.mxu0 %v1622
    %1667 = vmatprep.subr.bf16.mxu0 0
    %1668 = vmatpush1.bf16.msra.mxu0 %v1623
    %1669 = vmatprep.subr.bf16.mxu0 0
    %1670 = vmatpush1.bf16.msra.mxu0 %v1624
    %1671 = vmatprep.subr.bf16.mxu0 0
    %1672 = vmatpush1.bf16.msra.mxu0 %v1625
    %1673 = vmatprep.subr.bf16.mxu0 0
    %1674 = vmatpush1.bf16.msra.mxu0 %v1626
    %1675 = vmatprep.mubr.bf16.mxu0 %v1055
    %1676 = vmatmul.mubr.bf16.gmra.mrb[0].mxu0 %v1054
    %v1677 = vpop.f32.mrb[0].mxu0
    %v1678 = vadd.f32 %v1542, %v1677
    %v1679 = vpop.f32.mrb[0].mxu0
    %v1680 = vpop.f32.mrb[0].mxu0
    %v1681 = vpop.f32.mrb[0].mxu0
    %1682 = vdwg.mxu0
    %1685 = vrot.lane.b32.xlu0 %v1310, 32
    %v1686 = vpop.permute.xlu0 %1685
    %1687 = vrot.lane.b32.xlu0 %v1349, 32
    %v1688 = vpop.permute.xlu0 %1687
    %v1689 = vsel %vm1269, %v1686, %v1688
    %v1691 = vadd.f32 %v1678, %v1689
    %v1692 = vunpack.c.l.bf16 %v32
    %1694 = vset.pattern.permute.xlu0 33
    %1695 = vperm.xlu0 %1694, %v1486
    %v1696 = vpop.permute.xlu0 %1695
    %v1698 = vlaneseq
    %v1699 = vshrl.u32 %v1698, 7
    %v1700 = vsub.s32 5, %v1699
    %v1701 = vrot.slane %v1692, %v1700
    %v1702 = vmul.f32 %v1696, %v1701
    %v1703 = vadd.f32 %v1691, %v1702
    %v1704 = vlaneseq
    %v1705 = vshrl.u32 %v1704, 7
    %v1706 = vsub.s32 4, %v1705
    %v1707 = vrot.slane %v1692, %v1706
    %v1708 = vadd.f32 %v1703, %v1707
    %v1709 = vadd.f32 %v1708, %v1369
    %v1710 = vxor.u32 %v1709, 2147483648
    %v1711 = vmul.f32 %v1710, 1.442695
    %v1712 = vpow.pop %v1711
    %v1713 = vadd.f32 %v1712, 1.0
    %v1714 = vrcp.pop %v1713
    %v1715 = vmul.f32 1.0, %v1714
    %1717 = vrot.lane.b32.xlu0 %v1369, 64
    %v1718 = vpop.permute.xlu0 %1717
    %v1720 = vmul.f32 %v1715, %v1718
    %1722 = vrot.lane.b32.xlu0 %v1720, 64
    %v1723 = vpop.permute.xlu0 %1722
    %v1725 = vadd.f32 %v1708, %v1723
    %v1726 = vtanh.pop %v1725
    %v1727 = vsub.f32 1.0, %v1715
    %1729 = vrot.lane.b32.xlu0 %v1726, 96
    %v1730 = vpop.permute.xlu0 %1729
    %v1732 = vmul.f32 %v1727, %v1730
    %1733 = vrot.lane.b32.xlu0 %v1103, 64
    %v1734 = vpop.permute.xlu0 %1733
    %v1736 = vmul.f32 %v1715, %v1734
    %v1737 = vadd.f32 %v1732, %v1736
    %1739 = vrot.lane.b32.xlu0 %v1737, 96
    %v1740 = vpop.permute.xlu0 %1739
    %v1742 = vsel %vm1269, %v1740, %v1475
    %vm1743 = vcmask 523264
    %v1744 = vsel %vm1743, %v1742, 0.0
    %1745 = vst [vmem:[%s2] sm:$0x3] %v1744
    // Predicated region
    $region14: #{tsgm_forward.1} parent=1 // pred_check
      _
    $region15: #{tsgm_forward.1} parent=1 // pred_check_branch
      %1747 = sbr.rel (0) target = $region17
    $region16: #{tsgm_forward.1} parent=1 // pred_region
      _
    $region17: #{tsgm_forward.1} parent=1 // pred_fallthru
      _
    // Predicated region
    $region18: #{tsgm_forward.1} parent=1 // pred_check
      _
    $region19: #{tsgm_forward.1} parent=1 // pred_check_branch
      %1749 = sbr.rel (0) target = $region21
    $region20: #{tsgm_forward.1} parent=1 // pred_region
      _
    $region21: #{tsgm_forward.1} parent=1 // pred_fallthru
      _
    %1750 = vsyncpa [#allocation3], 1

</llo_original>
